<compile_context>
chip_gen: v7x
topology: tpu7x:2x2x1
jax: 0.10.0
libtpu: 0.0.40
codegen_flags: <defaults>
</compile_context>

<pallas_src>
import jax
import jax.numpy as jnp
import numpy as np
from jax.experimental import pallas as pl
from jax.experimental.pallas import tpu as pltpu

# ----- "config" constants (consistent with the module) -----
EMBEDDING_DIM = 32          # C
NUM_LEARNED_TOKENS = 8      # num_tokens T
TOKEN_LEARNER_DIM = 64      # bottleneck_dim D
ENCODER_DROPOUT_RATE = 0.1  # inactive: forward is deterministic (eval)
LN_EPS = 1e-5

_INV_SQRT2 = 0.7071067811865476
_SQRT2 = 1.4142135623730951


def _token_learner_kernel(x_ref, w1_ref, b1_ref, w2t_ref, b2t_ref,
                          feat_ref, wts_ref):
    """One batch-block (Bblk batch elements) per grid step.

    x_ref   : (Bblk, S, C)  raw tokens (after the torch-style .view)
    w1_ref  : (C, D)        Linear1 weight with LayerNorm gamma folded in
    b1_ref  : (1, D)        Linear1 bias with LayerNorm beta folded in
    w2t_ref : (T, D)        Linear2 weight, pre-transposed (out x in)
    b2t_ref : (T, 1)        Linear2 bias as a column
    feat_ref: (T, Bblk*C)   lane-dense token-feature slab
    wts_ref : (T, Bblk*S)   lane-dense softmax-weight slab
    """
    bblk, S, C = x_ref.shape
    T = w2t_ref.shape[0]

    x3 = x_ref[...].astype(jnp.float32)            # (Bblk, S, C) raw inputs (kept for pooling)
    x = x3.reshape(bblk * S, C)                    # (M, C): fills the MXU M dimension

    # ---- LayerNorm over C (affine folded into w1/b1 by the wrapper) ----
    mean = jnp.mean(x, axis=-1, keepdims=True)
    diff = x - mean
    var = jnp.mean(diff * diff, axis=-1, keepdims=True)
    xn = diff * jax.lax.rsqrt(var + LN_EPS)

    # ---- Linear(C -> D) + exact (erf) GELU, matching nn.GELU() ----
    h = jnp.dot(xn, w1_ref[...], preferred_element_type=jnp.float32) + b1_ref[...]
    h = 0.5 * h * (1.0 + jax.lax.erf(h * _INV_SQRT2))
    # Dropout is a no-op in the deterministic / eval forward.

    # ---- Linear(D -> T) directly in (T, M) layout: w2^T (T,D) · h (M,D)^T ----
    sel = jax.lax.dot_general(w2t_ref[...], h, (((1,), (1,)), ((), ())),
                              preferred_element_type=jnp.float32)
    sel = sel + b2t_ref[...]                        # (T, M)

    # ---- per-batch softmax over spatial dim + token pooling (static unroll) ----
    w_parts = []
    f_parts = []
    for b in range(bblk):
        s_b = sel[:, b * S:(b + 1) * S]             # (T, S)
        m = jnp.max(s_b, axis=-1, keepdims=True)
        e = jnp.exp(s_b - m)
        d = jnp.sum(e, axis=-1, keepdims=True)
        inv = pl.reciprocal(d, approx=True)         # EUP slot — effectively free
        inv = inv * (2.0 - d * inv)                 # one Newton step: f32 accuracy, no VPU divide
        w_b = e * inv                               # (T, S) softmax weights
        # einsum('...si,...id->...sd', weights, feat) : (T,S) @ (S,C)
        f_parts.append(jnp.dot(w_b, x3[b], preferred_element_type=jnp.float32))  # (T, C)
        w_parts.append(w_b)

    # Lane-dense stores: (T, Bblk*S) and (T, Bblk*C) slabs.
    wts_ref[...] = jnp.concatenate(w_parts, axis=1).astype(wts_ref.dtype)
    feat_ref[...] = jnp.concatenate(f_parts, axis=1).astype(feat_ref.dtype)


def _pick_batch_block(B, S, C):
    """Pick Bblk: fill the MXU M dim (Bblk*S rows) while keeping >=2 grid
    steps (so both v7x TensorCores get work) and keeping the lane-dense output
    blocks 128-lane aligned. Otherwise fall back to a single full-batch step
    (best on single-TC v5e/v6e for tiny B: no per-step grid overhead)."""
    for cand in (4, 2):
        if (B % cand == 0 and B // cand >= 2
                and (cand * S) % 128 == 0 and (cand * C) % 128 == 0):
            return cand
    return B


def token_learner_v11(x_nchw, params):
    """Forward pass of TokenLearnerV11.

    x_nchw: (B, C, H, W) float32
    returns (feat, weights) with feat: (B, C, T), weights: (B, T, H*W)
    """
    B, C, H, W = x_nchw.shape
    S = H * W
    T = NUM_LEARNED_TOKENS
    D = TOKEN_LEARNER_DIM

    # torch: inputs.view(B, H*W, C) — raw row-major memory reinterpretation.
    x = jnp.reshape(x_nchw, (B, S, C))

    # Trace-time parameter folding (free):
    #   (xhat*g + beta) @ W1 + b1 == xhat @ (g[:,None]*W1) + (beta @ W1 + b1)
    w1f = params["ln_gamma"][:, None] * params["w1"]                   # (C, D)
    b1f = params["ln_beta"][None, :] @ params["w1"] + params["b1"][None, :]  # (1, D)
    w2t = params["w2"].T                                               # (T, D)
    b2t = params["b2"].reshape(T, 1)                                   # (T, 1)

    bblk = _pick_batch_block(B, S, C)
    grid = (B // bblk,)

    feat_slab, wts_slab = pl.pallas_call(
        _token_learner_kernel,
        out_shape=(
            jax.ShapeDtypeStruct((T, B * C), jnp.float32),   # token features (lane-dense slab)
            jax.ShapeDtypeStruct((T, B * S), jnp.float32),   # softmax weights (lane-dense slab)
        ),
        grid_spec=pltpu.PrefetchScalarGridSpec(
            num_scalar_prefetch=0,
            grid=grid,
            in_specs=[
                pl.BlockSpec((bblk, S, C), lambda i: (i, 0, 0)),   # x, per batch-block
                pl.BlockSpec((C, D), lambda i: (0, 0)),            # w1 (LN-folded), resident
                pl.BlockSpec((1, D), lambda i: (0, 0)),            # b1 (LN-folded), resident
                pl.BlockSpec((T, D), lambda i: (0, 0)),            # w2^T, resident
                pl.BlockSpec((T, 1), lambda i: (0, 0)),            # b2 column, resident
            ],
            out_specs=[
                pl.BlockSpec((T, bblk * C), lambda i: (0, i)),
                pl.BlockSpec((T, bblk * S), lambda i: (0, i)),
            ],
        ),
        compiler_params=pltpu.CompilerParams(
            dimension_semantics=("parallel",)),
    )(x, w1f, b1f, w2t, b2t)

    # Un-slab in the wrapper (tiny layout plumbing, not compute).
    feat_btc = jnp.transpose(feat_slab.reshape(T, B, C), (1, 0, 2))    # (B, T, C)
    weights = jnp.transpose(wts_slab.reshape(T, B, S), (1, 0, 2))      # (B, T, S)
    # torch: feat.view(B, C, num_tokens) — a memory reinterpretation, NOT a transpose.
    feat = jnp.reshape(feat_btc, (B, C, T))
    return feat, weights


def _reference(x_nchw, params):
    """Pure-JAX reference mirroring the PyTorch forward exactly."""
    B, C, H, W = x_nchw.shape
    x = jnp.reshape(x_nchw, (B, H * W, C))
    mean = jnp.mean(x, axis=-1, keepdims=True)
    var = jnp.mean((x - mean) ** 2, axis=-1, keepdims=True)
    xn = (x - mean) / jnp.sqrt(var + LN_EPS)
    xn = xn * params["ln_gamma"] + params["ln_beta"]
    h = xn @ params["w1"] + params["b1"]
    h = 0.5 * h * (1.0 + jax.lax.erf(h / _SQRT2))
    logits = h @ params["w2"] + params["b2"]
    sel = jnp.transpose(logits, (0, 2, 1))
    wts = jax.nn.softmax(sel, axis=-1)
    feat = jnp.einsum("bsi,bid->bsd", wts, x)
    return jnp.reshape(feat, (B, C, NUM_LEARNED_TOKENS)), wts


def init_params(key):
    C, D, T = EMBEDDING_DIM, TOKEN_LEARNER_DIM, NUM_LEARNED_TOKENS
    k1, k2, k3, k4, k5, k6 = jax.random.split(key, 6)
    # TODO(synk): the custom LayerNorm() in the reference repo is unspecified;
    # standard last-dim LayerNorm with affine params (gamma, beta) is assumed.
    return {
        "ln_gamma": 1.0 + 0.1 * jax.random.normal(k5, (C,), jnp.float32),
        "ln_beta": 0.1 * jax.random.normal(k6, (C,), jnp.float32),
        "w1": jax.random.normal(k1, (C, D), jnp.float32) * 0.05,
        "b1": jax.random.normal(k2, (D,), jnp.float32) * 0.01,
        "w2": jax.random.normal(k3, (D, T), jnp.float32) * 0.05,
        "b2": jax.random.normal(k4, (T,), jnp.float32) * 0.01,
    }


if __name__ == "__main__":
    key = jax.random.PRNGKey(0)
    kx, kp = jax.random.split(key)

    C, H, W = EMBEDDING_DIM, 8, 8
    params = init_params(kp)

    # B=8 exercises the batched path (Bblk=4, grid=(2,)); B=2 exercises the
    # single-step full-batch fallback.
    for B in (8, 2):
        x = jax.random.normal(jax.random.fold_in(kx, B), (B, C, H, W), jnp.float32)

        feat, weights = token_learner_v11(x, params)
        feat = jax.block_until_ready(feat)
        weights = jax.block_until_ready(weights)

        feat_ref, wts_ref = _reference(x, params)
        np.testing.assert_allclose(np.asarray(feat), np.asarray(feat_ref),
                                    rtol=1e-3, atol=1e-3)
        np.testing.assert_allclose(np.asarray(weights), np.asarray(wts_ref),
                                    rtol=1e-3, atol=1e-3)

    print("KERNEL_OK")
</pallas_src>

<mosaic_0001>
module attributes {stable_mosaic.version = 11 : i64} {
  func.func @_token_learner_kernel(%arg0: i32, %arg1: memref<4x64x32xf32, #tpu.memory_space<vmem>>, %arg2: memref<32x64xf32, #tpu.memory_space<vmem>>, %arg3: memref<1x64xf32, #tpu.memory_space<vmem>>, %arg4: memref<8x64xf32, #tpu.memory_space<vmem>>, %arg5: memref<8x1xf32, #tpu.memory_space<vmem>>, %arg6: memref<8x128xf32, #tpu.memory_space<vmem>>, %arg7: memref<8x256xf32, #tpu.memory_space<vmem>>) attributes {dimension_semantics = [#tpu.dimension_semantics<parallel>], iteration_bounds = array<i64: 2>, scalar_prefetch = 0 : i64, scratch_operands = 0 : i64, tpu.core_type = #tpu.core_type<tc>, window_params = [{transform_indices = @transform_0, window_bounds = array<i64: 4, 64, 32>}, {pipeline_mode = #tpu.pipeline_mode<synchronous>, transform_indices = @transform_1, window_bounds = array<i64: 32, 64>}, {pipeline_mode = #tpu.pipeline_mode<synchronous>, transform_indices = @transform_2, window_bounds = array<i64: 1, 64>}, {pipeline_mode = #tpu.pipeline_mode<synchronous>, transform_indices = @transform_3, window_bounds = array<i64: 8, 64>}, {pipeline_mode = #tpu.pipeline_mode<synchronous>, transform_indices = @transform_4, window_bounds = array<i64: 8, 1>}, {transform_indices = @transform_5, window_bounds = array<i64: 8, 128>}, {transform_indices = @transform_6, window_bounds = array<i64: 8, 256>}]} {
    %c0 = arith.constant 0 : index
    %c0_0 = arith.constant 0 : index
    %c0_1 = arith.constant 0 : index
    %0 = vector.load %arg1[%c0, %c0_0, %c0_1] : memref<4x64x32xf32, #tpu.memory_space<vmem>>, vector<4x64x32xf32>
    %1 = vector.shape_cast %0 : vector<4x64x32xf32> to vector<256x32xf32>
    %cst = arith.constant dense<0.000000e+00> : vector<256xf32>
    %2 = vector.multi_reduction <add>, %1, %cst [1] : vector<256x32xf32> to vector<256xf32>
    %3 = vector.shape_cast %2 : vector<256xf32> to vector<256x1xf32>
    %cst_2 = arith.constant 3.200000e+01 : f32
    %4 = vector.broadcast %cst_2 : f32 to vector<256x1xf32>
    %5 = arith.divf %3, %4 : vector<256x1xf32>
    %6 = vector.broadcast %5 : vector<256x1xf32> to vector<256x32xf32>
    %7 = arith.subf %1, %6 : vector<256x32xf32>
    %8 = arith.mulf %7, %7 : vector<256x32xf32>
    %cst_3 = arith.constant dense<0.000000e+00> : vector<256xf32>
    %9 = vector.multi_reduction <add>, %8, %cst_3 [1] : vector<256x32xf32> to vector<256xf32>
    %10 = vector.shape_cast %9 : vector<256xf32> to vector<256x1xf32>
    %cst_4 = arith.constant 3.200000e+01 : f32
    %11 = vector.broadcast %cst_4 : f32 to vector<256x1xf32>
    %12 = arith.divf %10, %11 : vector<256x1xf32>
    %cst_5 = arith.constant 9.99999974E-6 : f32
    %13 = vector.broadcast %cst_5 : f32 to vector<256x1xf32>
    %14 = arith.addf %12, %13 : vector<256x1xf32>
    %15 = math.rsqrt %14 : vector<256x1xf32>
    %16 = vector.broadcast %15 : vector<256x1xf32> to vector<256x32xf32>
    %17 = arith.mulf %7, %16 : vector<256x32xf32>
    %c0_6 = arith.constant 0 : index
    %c0_7 = arith.constant 0 : index
    %18 = vector.load %arg2[%c0_6, %c0_7] : memref<32x64xf32, #tpu.memory_space<vmem>>, vector<32x64xf32>
    %cst_8 = arith.constant dense<0.000000e+00> : vector<256x64xf32>
    %19 = tpu.matmul %17, %18, %cst_8 {dimension_numbers = #tpu.dot_dimension_numbers<[1], [0], [0], [1], [0, 0, 1, 1], [], []>} : vector<256x32xf32>, vector<32x64xf32>, vector<256x64xf32> -> vector<256x64xf32>
    %c0_9 = arith.constant 0 : index
    %c0_10 = arith.constant 0 : index
    %20 = vector.load %arg3[%c0_9, %c0_10] : memref<1x64xf32, #tpu.memory_space<vmem>>, vector<1x64xf32>
    %21 = vector.broadcast %20 : vector<1x64xf32> to vector<256x64xf32>
    %22 = arith.addf %19, %21 : vector<256x64xf32>
    %cst_11 = arith.constant 5.000000e-01 : f32
    %23 = vector.broadcast %cst_11 : f32 to vector<256x64xf32>
    %24 = arith.mulf %23, %22 : vector<256x64xf32>
    %cst_12 = arith.constant 0.707106769 : f32
    %25 = vector.broadcast %cst_12 : f32 to vector<256x64xf32>
    %26 = arith.mulf %22, %25 : vector<256x64xf32>
    %27 = math.erf %26 : vector<256x64xf32>
    %cst_13 = arith.constant 1.000000e+00 : f32
    %28 = vector.broadcast %cst_13 : f32 to vector<256x64xf32>
    %29 = arith.addf %28, %27 : vector<256x64xf32>
    %30 = arith.mulf %24, %29 : vector<256x64xf32>
    %c0_14 = arith.constant 0 : index
    %c0_15 = arith.constant 0 : index
    %31 = vector.load %arg4[%c0_14, %c0_15] : memref<8x64xf32, #tpu.memory_space<vmem>>, vector<8x64xf32>
    %cst_16 = arith.constant dense<0.000000e+00> : vector<8x256xf32>
    %32 = tpu.matmul %31, %30, %cst_16 {dimension_numbers = #tpu.dot_dimension_numbers<[1], [1], [0], [0], [0, 0, 1, 0], [], []>} : vector<8x64xf32>, vector<256x64xf32>, vector<8x256xf32> -> vector<8x256xf32>
    %c0_17 = arith.constant 0 : index
    %c0_18 = arith.constant 0 : index
    %33 = vector.load %arg5[%c0_17, %c0_18] : memref<8x1xf32, #tpu.memory_space<vmem>>, vector<8x1xf32>
    %34 = vector.broadcast %33 : vector<8x1xf32> to vector<8x256xf32>
    %35 = arith.addf %32, %34 : vector<8x256xf32>
    %36 = vector.extract_strided_slice %35 {offsets = [0, 0], sizes = [8, 64], strides = [1, 1]} : vector<8x256xf32> to vector<8x64xf32>
    %cst_19 = arith.constant dense<0xFF800000> : vector<8xf32>
    %37 = vector.multi_reduction <maximumf>, %36, %cst_19 [1] : vector<8x64xf32> to vector<8xf32>
    %38 = vector.shape_cast %37 : vector<8xf32> to vector<8x1xf32>
    %39 = vector.broadcast %38 : vector<8x1xf32> to vector<8x64xf32>
    %40 = arith.subf %36, %39 : vector<8x64xf32>
    %41 = math.exp %40 : vector<8x64xf32>
    %cst_20 = arith.constant dense<0.000000e+00> : vector<8xf32>
    %42 = vector.multi_reduction <add>, %41, %cst_20 [1] : vector<8x64xf32> to vector<8xf32>
    %43 = vector.shape_cast %42 : vector<8xf32> to vector<8x1xf32>
    %44 = tpu.reciprocal %43 {approx = true} : vector<8x1xf32> -> vector<8x1xf32>
    %45 = arith.mulf %43, %44 : vector<8x1xf32>
    %cst_21 = arith.constant 2.000000e+00 : f32
    %46 = vector.broadcast %cst_21 : f32 to vector<8x1xf32>
    %47 = arith.subf %46, %45 : vector<8x1xf32>
    %48 = arith.mulf %44, %47 : vector<8x1xf32>
    %49 = vector.broadcast %48 : vector<8x1xf32> to vector<8x64xf32>
    %50 = arith.mulf %41, %49 : vector<8x64xf32>
    %51 = vector.extract_strided_slice %0 {offsets = [0, 0, 0], sizes = [1, 64, 32], strides = [1, 1, 1]} : vector<4x64x32xf32> to vector<1x64x32xf32>
    %52 = vector.shape_cast %51 : vector<1x64x32xf32> to vector<64x32xf32>
    %cst_22 = arith.constant dense<0.000000e+00> : vector<8x32xf32>
    %53 = tpu.matmul %50, %52, %cst_22 {dimension_numbers = #tpu.dot_dimension_numbers<[1], [0], [0], [1], [0, 0, 1, 1], [], []>} : vector<8x64xf32>, vector<64x32xf32>, vector<8x32xf32> -> vector<8x32xf32>
    %54 = vector.extract_strided_slice %35 {offsets = [0, 64], sizes = [8, 64], strides = [1, 1]} : vector<8x256xf32> to vector<8x64xf32>
    %cst_23 = arith.constant dense<0xFF800000> : vector<8xf32>
    %55 = vector.multi_reduction <maximumf>, %54, %cst_23 [1] : vector<8x64xf32> to vector<8xf32>
    %56 = vector.shape_cast %55 : vector<8xf32> to vector<8x1xf32>
    %57 = vector.broadcast %56 : vector<8x1xf32> to vector<8x64xf32>
    %58 = arith.subf %54, %57 : vector<8x64xf32>
    %59 = math.exp %58 : vector<8x64xf32>
    %cst_24 = arith.constant dense<0.000000e+00> : vector<8xf32>
    %60 = vector.multi_reduction <add>, %59, %cst_24 [1] : vector<8x64xf32> to vector<8xf32>
    %61 = vector.shape_cast %60 : vector<8xf32> to vector<8x1xf32>
    %62 = tpu.reciprocal %61 {approx = true} : vector<8x1xf32> -> vector<8x1xf32>
    %63 = arith.mulf %61, %62 : vector<8x1xf32>
    %cst_25 = arith.constant 2.000000e+00 : f32
    %64 = vector.broadcast %cst_25 : f32 to vector<8x1xf32>
    %65 = arith.subf %64, %63 : vector<8x1xf32>
    %66 = arith.mulf %62, %65 : vector<8x1xf32>
    %67 = vector.broadcast %66 : vector<8x1xf32> to vector<8x64xf32>
    %68 = arith.mulf %59, %67 : vector<8x64xf32>
    %69 = vector.extract_strided_slice %0 {offsets = [1, 0, 0], sizes = [1, 64, 32], strides = [1, 1, 1]} : vector<4x64x32xf32> to vector<1x64x32xf32>
    %70 = vector.shape_cast %69 : vector<1x64x32xf32> to vector<64x32xf32>
    %cst_26 = arith.constant dense<0.000000e+00> : vector<8x32xf32>
    %71 = tpu.matmul %68, %70, %cst_26 {dimension_numbers = #tpu.dot_dimension_numbers<[1], [0], [0], [1], [0, 0, 1, 1], [], []>} : vector<8x64xf32>, vector<64x32xf32>, vector<8x32xf32> -> vector<8x32xf32>
    %72 = vector.extract_strided_slice %35 {offsets = [0, 128], sizes = [8, 64], strides = [1, 1]} : vector<8x256xf32> to vector<8x64xf32>
    %cst_27 = arith.constant dense<0xFF800000> : vector<8xf32>
    %73 = vector.multi_reduction <maximumf>, %72, %cst_27 [1] : vector<8x64xf32> to vector<8xf32>
    %74 = vector.shape_cast %73 : vector<8xf32> to vector<8x1xf32>
    %75 = vector.broadcast %74 : vector<8x1xf32> to vector<8x64xf32>
    %76 = arith.subf %72, %75 : vector<8x64xf32>
    %77 = math.exp %76 : vector<8x64xf32>
    %cst_28 = arith.constant dense<0.000000e+00> : vector<8xf32>
    %78 = vector.multi_reduction <add>, %77, %cst_28 [1] : vector<8x64xf32> to vector<8xf32>
    %79 = vector.shape_cast %78 : vector<8xf32> to vector<8x1xf32>
    %80 = tpu.reciprocal %79 {approx = true} : vector<8x1xf32> -> vector<8x1xf32>
    %81 = arith.mulf %79, %80 : vector<8x1xf32>
    %cst_29 = arith.constant 2.000000e+00 : f32
    %82 = vector.broadcast %cst_29 : f32 to vector<8x1xf32>
    %83 = arith.subf %82, %81 : vector<8x1xf32>
    %84 = arith.mulf %80, %83 : vector<8x1xf32>
    %85 = vector.broadcast %84 : vector<8x1xf32> to vector<8x64xf32>
    %86 = arith.mulf %77, %85 : vector<8x64xf32>
    %87 = vector.extract_strided_slice %0 {offsets = [2, 0, 0], sizes = [1, 64, 32], strides = [1, 1, 1]} : vector<4x64x32xf32> to vector<1x64x32xf32>
    %88 = vector.shape_cast %87 : vector<1x64x32xf32> to vector<64x32xf32>
    %cst_30 = arith.constant dense<0.000000e+00> : vector<8x32xf32>
    %89 = tpu.matmul %86, %88, %cst_30 {dimension_numbers = #tpu.dot_dimension_numbers<[1], [0], [0], [1], [0, 0, 1, 1], [], []>} : vector<8x64xf32>, vector<64x32xf32>, vector<8x32xf32> -> vector<8x32xf32>
    %90 = vector.extract_strided_slice %35 {offsets = [0, 192], sizes = [8, 64], strides = [1, 1]} : vector<8x256xf32> to vector<8x64xf32>
    %cst_31 = arith.constant dense<0xFF800000> : vector<8xf32>
    %91 = vector.multi_reduction <maximumf>, %90, %cst_31 [1] : vector<8x64xf32> to vector<8xf32>
    %92 = vector.shape_cast %91 : vector<8xf32> to vector<8x1xf32>
    %93 = vector.broadcast %92 : vector<8x1xf32> to vector<8x64xf32>
    %94 = arith.subf %90, %93 : vector<8x64xf32>
    %95 = math.exp %94 : vector<8x64xf32>
    %cst_32 = arith.constant dense<0.000000e+00> : vector<8xf32>
    %96 = vector.multi_reduction <add>, %95, %cst_32 [1] : vector<8x64xf32> to vector<8xf32>
    %97 = vector.shape_cast %96 : vector<8xf32> to vector<8x1xf32>
    %98 = tpu.reciprocal %97 {approx = true} : vector<8x1xf32> -> vector<8x1xf32>
    %99 = arith.mulf %97, %98 : vector<8x1xf32>
    %cst_33 = arith.constant 2.000000e+00 : f32
    %100 = vector.broadcast %cst_33 : f32 to vector<8x1xf32>
    %101 = arith.subf %100, %99 : vector<8x1xf32>
    %102 = arith.mulf %98, %101 : vector<8x1xf32>
    %103 = vector.broadcast %102 : vector<8x1xf32> to vector<8x64xf32>
    %104 = arith.mulf %95, %103 : vector<8x64xf32>
    %105 = vector.extract_strided_slice %0 {offsets = [3, 0, 0], sizes = [1, 64, 32], strides = [1, 1, 1]} : vector<4x64x32xf32> to vector<1x64x32xf32>
    %106 = vector.shape_cast %105 : vector<1x64x32xf32> to vector<64x32xf32>
    %cst_34 = arith.constant dense<0.000000e+00> : vector<8x32xf32>
    %107 = tpu.matmul %104, %106, %cst_34 {dimension_numbers = #tpu.dot_dimension_numbers<[1], [0], [0], [1], [0, 0, 1, 1], [], []>} : vector<8x64xf32>, vector<64x32xf32>, vector<8x32xf32> -> vector<8x32xf32>
    %108 = tpu.concatenate %50, %68, %86, %104 in 1 : vector<8x64xf32>, vector<8x64xf32>, vector<8x64xf32>, vector<8x64xf32> -> vector<8x256xf32>
    %c0_35 = arith.constant 0 : index
    %c0_36 = arith.constant 0 : index
    %109 = vector.load %arg7[%c0_35, %c0_36] : memref<8x256xf32, #tpu.memory_space<vmem>>, vector<8x256xf32>
    tpu.vector_store %arg7[%c0_35, %c0_36], %108 {strides = array<i32>} : memref<8x256xf32, #tpu.memory_space<vmem>>, vector<8x256xf32>,
    %110 = tpu.concatenate %53, %71, %89, %107 in 1 : vector<8x32xf32>, vector<8x32xf32>, vector<8x32xf32>, vector<8x32xf32> -> vector<8x128xf32>
    %c0_37 = arith.constant 0 : index
    %c0_38 = arith.constant 0 : index
    %111 = vector.load %arg6[%c0_37, %c0_38] : memref<8x128xf32, #tpu.memory_space<vmem>>, vector<8x128xf32>
    tpu.vector_store %arg6[%c0_37, %c0_38], %110 {strides = array<i32>} : memref<8x128xf32, #tpu.memory_space<vmem>>, vector<8x128xf32>,
    return
  }
  func.func @transform_0(%arg0: i32) -> (i32, i32, i32) {
    %c0_i32 = arith.constant 0 : i32
    %c0_i32_0 = arith.constant 0 : i32
    %c0_i32_1 = arith.constant 0 : i32
    return %arg0, %c0_i32, %c0_i32_0 : i32, i32, i32
  }
  func.func @transform_1(%arg0: i32) -> (i32, i32) {
    %c0_i32 = arith.constant 0 : i32
    %c0_i32_0 = arith.constant 0 : i32
    %c0_i32_1 = arith.constant 0 : i32
    return %c0_i32, %c0_i32_0 : i32, i32
  }
  func.func @transform_2(%arg0: i32) -> (i32, i32) {
    %c0_i32 = arith.constant 0 : i32
    %c0_i32_0 = arith.constant 0 : i32
    %c0_i32_1 = arith.constant 0 : i32
    return %c0_i32, %c0_i32_0 : i32, i32
  }
  func.func @transform_3(%arg0: i32) -> (i32, i32) {
    %c0_i32 = arith.constant 0 : i32
    %c0_i32_0 = arith.constant 0 : i32
    %c0_i32_1 = arith.constant 0 : i32
    return %c0_i32, %c0_i32_0 : i32, i32
  }
  func.func @transform_4(%arg0: i32) -> (i32, i32) {
    %c0_i32 = arith.constant 0 : i32
    %c0_i32_0 = arith.constant 0 : i32
    %c0_i32_1 = arith.constant 0 : i32
    return %c0_i32, %c0_i32_0 : i32, i32
  }
  func.func @transform_5(%arg0: i32) -> (i32, i32) {
    %c0_i32 = arith.constant 0 : i32
    %c0_i32_0 = arith.constant 0 : i32
    return %c0_i32, %arg0 : i32, i32
  }
  func.func @transform_6(%arg0: i32) -> (i32, i32) {
    %c0_i32 = arith.constant 0 : i32
    %c0_i32_0 = arith.constant 0 : i32
    return %c0_i32, %arg0 : i32, i32
  }
}

</mosaic_0001>

<llo_original>
// kernel: tpu_custom_call.1
$region0: #{tpu_custom_call.1}
  #allocation0 [shape = 'u32[]', space=smem, size = 0x4, offset = 0x4, fixed_abs, tag = 'smem constant byte address 0x4 - core index']
  #allocation1 [shape = 'u32[144,128]{1,0:T(1,128)}', space=vmem, size = 0x12000, scoped, tag = 'internal scratch']
  %s0 = inlined_call_operand.vmem [shape: f32[8,64,32], index: 0, kind: input, shape index: {}]
  %s1 = inlined_call_operand.vmem [shape: f32[32,64], index: 1, kind: input, shape index: {}]
  %s2 = inlined_call_operand.vmem [shape: f32[1,64], index: 2, kind: input, shape index: {}]
  %s3 = inlined_call_operand.vmem [shape: f32[8,64], index: 3, kind: input, shape index: {}]
  %s4 = inlined_call_operand.vmem [shape: f32[8,1], index: 4, kind: input, shape index: {}]
  %s5 = inlined_call_operand.hbm [shape: f32[8,256], index: 5, kind: output, shape index: {0}]
  %s6 = inlined_call_operand.hbm [shape: f32[8,512], index: 6, kind: output, shape index: {1}]
  %7 = xla_tuple %s5, %s6
  %s8 = sld [smem:[#allocation0]]
  $region61: #{tpu_custom_call.1} parent=0
    _
  %s10 = ssub.s32 1, %s8
  %s11 = scalar_select 0, %s10, %s8
  $region1: #{tpu_custom_call.1} parent=0
    #allocation2 [shape = 'u8[8192]{0}', space=vmem, size = 0x2000, scoped, tag = 'output window, operand 0']
    #allocation3 [shape = 's32[2]{0}', space=sflag, size = 0x8, scoped, tag = 'scoped memory for tpu_custom_call.1']
    #allocation4 [shape = 'u8[16384]{0}', space=vmem, size = 0x4000, scoped, tag = 'output window, operand 1']
    #allocation5 [shape = 's32[2]{0}', space=sflag, size = 0x8, scoped, tag = 'scoped memory for tpu_custom_call.1']
    %12 = vsyncpa [#allocation3], 0
    %s13 = scalar_lea.sflag [#allocation3], 1
    %14 = vsyncpa %s13, 0
    %15 = vsyncpa [#allocation5], 0
    %s16 = scalar_lea.sflag [#allocation5], 1
    %17 = vsyncpa %s16, 0
    loop: start=0, step=1, limit=4
    $region2: #{tpu_custom_call.1} parent=1 // loop_pre_header
      _
    $region3: #{tpu_custom_call.1} parent=1 // loop_header
      %s19 = sphi 0, %s23
      %p20 = scmp.ge.s32.totalorder %s19, 4
      %s29 = sphi 0, %s31
      %s32 = sphi 0, %s29
      %s33 = sphi 0, %s32
      %s49 = sphi 0, %s33
      %s53 = sphi 0, %s53
      %s55 = sphi 0, %s53
      %s56 = sphi 0, %s55
      %s70 = sphi 0, %s56
      %s74 = sphi 0, %s74
      %s76 = sphi 0, %s74
      %s77 = sphi 0, %s76
      %s91 = sphi 0, %s77
      %s95 = sphi 0, %s95
      %s97 = sphi 0, %s95
      %s98 = sphi 0, %s97
      %s112 = sphi 0, %s98
      %s116 = sphi 0, %s116
      %s118 = sphi 0, %s116
      %s119 = sphi 0, %s118
      %s133 = sphi 0, %s119
      %s139 = sphi 0, %s141
      %s142 = sphi 0, %s139
      %s143 = sphi 0, %s142
      %s159 = sphi 0, %s143
      %s165 = sphi 0, %s167
      %s168 = sphi 0, %s165
      %s169 = sphi 0, %s168
      %s185 = sphi 0, %s169
    $region4: #{tpu_custom_call.1} parent=1 // loop_header_branch
      %22 = sbr.rel (%p20) target = $region8
    $region5: #{tpu_custom_call.1} parent=1 // loop_body
      %s24 = ssub.s32 %s19, 1
      %s25 = ssub.s32 %s19, 2
      %s26 = sadd.s32 %s19, 1
      %s27 = ssub.s32 %s19, %s26
      %p28 = scmp.eq.s32.totalorder %s27, 0
      %s30 = sadd.s32 %s29, 1
      %s31 = scalar_select %p28, %s29, %s30
      %p34 = pneg %p28
      %p35 = scmp.eq.s32.totalorder %s19, 1
      %p36 = por %p34, %p35
      %p37 = scmp.ne.s32.totalorder %s29, %s32
      %p38 = scmp.eq.s32.totalorder %s19, 0
      %p39 = por %p37, %p38
      %p40 = scmp.ne.s32.totalorder %s29, %s32
      %p41 = scmp.eq.s32.totalorder %s24, 1
      %p42 = por %p40, %p41
      %p43 = scmp.ne.s32.totalorder %s32, %s33
      %p44 = scmp.eq.s32.totalorder %s24, 0
      %p45 = por %p43, %p44
      %p46 = scmp.ne.s32.totalorder %s32, %s33
      %p47 = scmp.eq.s32.totalorder %s25, 1
      %p48 = por %p46, %p47
      %p50 = scmp.ne.s32.totalorder %s33, %s49
      %p51 = scmp.eq.s32.totalorder %s25, 0
      %p52 = por %p50, %p51
      %s54 = sadd.s32 %s53, 1
      %p57 = scmp.eq.s32.totalorder %s19, 1
      %p58 = scmp.ne.s32.totalorder %s53, %s55
      %p59 = scmp.eq.s32.totalorder %s19, 0
      %p60 = por %p58, %p59
      %p61 = scmp.ne.s32.totalorder %s53, %s55
      %p62 = scmp.eq.s32.totalorder %s24, 1
      %p63 = por %p61, %p62
      %p64 = scmp.ne.s32.totalorder %s55, %s56
      %p65 = scmp.eq.s32.totalorder %s24, 0
      %p66 = por %p64, %p65
      %p67 = scmp.ne.s32.totalorder %s55, %s56
      %p68 = scmp.eq.s32.totalorder %s25, 1
      %p69 = por %p67, %p68
      %p71 = scmp.ne.s32.totalorder %s56, %s70
      %p72 = scmp.eq.s32.totalorder %s25, 0
      %p73 = por %p71, %p72
      %s75 = sadd.s32 %s74, 1
      %p78 = scmp.eq.s32.totalorder %s19, 1
      %p79 = scmp.ne.s32.totalorder %s74, %s76
      %p80 = scmp.eq.s32.totalorder %s19, 0
      %p81 = por %p79, %p80
      %p82 = scmp.ne.s32.totalorder %s74, %s76
      %p83 = scmp.eq.s32.totalorder %s24, 1
      %p84 = por %p82, %p83
      %p85 = scmp.ne.s32.totalorder %s76, %s77
      %p86 = scmp.eq.s32.totalorder %s24, 0
      %p87 = por %p85, %p86
      %p88 = scmp.ne.s32.totalorder %s76, %s77
      %p89 = scmp.eq.s32.totalorder %s25, 1
      %p90 = por %p88, %p89
      %p92 = scmp.ne.s32.totalorder %s77, %s91
      %p93 = scmp.eq.s32.totalorder %s25, 0
      %p94 = por %p92, %p93
      %s96 = sadd.s32 %s95, 1
      %p99 = scmp.eq.s32.totalorder %s19, 1
      %p100 = scmp.ne.s32.totalorder %s95, %s97
      %p101 = scmp.eq.s32.totalorder %s19, 0
      %p102 = por %p100, %p101
      %p103 = scmp.ne.s32.totalorder %s95, %s97
      %p104 = scmp.eq.s32.totalorder %s24, 1
      %p105 = por %p103, %p104
      %p106 = scmp.ne.s32.totalorder %s97, %s98
      %p107 = scmp.eq.s32.totalorder %s24, 0
      %p108 = por %p106, %p107
      %p109 = scmp.ne.s32.totalorder %s97, %s98
      %p110 = scmp.eq.s32.totalorder %s25, 1
      %p111 = por %p109, %p110
      %p113 = scmp.ne.s32.totalorder %s98, %s112
      %p114 = scmp.eq.s32.totalorder %s25, 0
      %p115 = por %p113, %p114
      %s117 = sadd.s32 %s116, 1
      %p120 = scmp.eq.s32.totalorder %s19, 1
      %p121 = scmp.ne.s32.totalorder %s116, %s118
      %p122 = scmp.eq.s32.totalorder %s19, 0
      %p123 = por %p121, %p122
      %p124 = scmp.ne.s32.totalorder %s116, %s118
      %p125 = scmp.eq.s32.totalorder %s24, 1
      %p126 = por %p124, %p125
      %p127 = scmp.ne.s32.totalorder %s118, %s119
      %p128 = scmp.eq.s32.totalorder %s24, 0
      %p129 = por %p127, %p128
      %p130 = scmp.ne.s32.totalorder %s118, %s119
      %p131 = scmp.eq.s32.totalorder %s25, 1
      %p132 = por %p130, %p131
      %p134 = scmp.ne.s32.totalorder %s119, %s133
      %p135 = scmp.eq.s32.totalorder %s25, 0
      %p136 = por %p134, %p135
      %s137 = ssub.s32 %s19, %s26
      %p138 = scmp.eq.s32.totalorder %s137, 0
      %s140 = sadd.s32 %s139, 1
      %s141 = scalar_select %p138, %s139, %s140
      %p144 = pneg %p138
      %p145 = scmp.eq.s32.totalorder %s19, 1
      %p146 = por %p144, %p145
      %p147 = scmp.ne.s32.totalorder %s139, %s142
      %p148 = scmp.eq.s32.totalorder %s19, 0
      %p149 = por %p147, %p148
      %p150 = scmp.ne.s32.totalorder %s139, %s142
      %p151 = scmp.eq.s32.totalorder %s24, 1
      %p152 = por %p150, %p151
      %p153 = scmp.ne.s32.totalorder %s142, %s143
      %p154 = scmp.eq.s32.totalorder %s24, 0
      %p155 = por %p153, %p154
      %p156 = scmp.ne.s32.totalorder %s142, %s143
      %p157 = scmp.eq.s32.totalorder %s25, 1
      %p158 = por %p156, %p157
      %p160 = scmp.ne.s32.totalorder %s143, %s159
      %p161 = scmp.eq.s32.totalorder %s25, 0
      %p162 = por %p160, %p161
      %s163 = ssub.s32 %s19, %s26
      %p164 = scmp.eq.s32.totalorder %s163, 0
      %s166 = sadd.s32 %s165, 1
      %s167 = scalar_select %p164, %s165, %s166
      %p170 = pneg %p164
      %p171 = scmp.eq.s32.totalorder %s19, 1
      %p172 = por %p170, %p171
      %p173 = scmp.ne.s32.totalorder %s165, %s168
      %p174 = scmp.eq.s32.totalorder %s19, 0
      %p175 = por %p173, %p174
      %p176 = scmp.ne.s32.totalorder %s165, %s168
      %p177 = scmp.eq.s32.totalorder %s24, 1
      %p178 = por %p176, %p177
      %p179 = scmp.ne.s32.totalorder %s168, %s169
      %p180 = scmp.eq.s32.totalorder %s24, 0
      %p181 = por %p179, %p180
      %p182 = scmp.ne.s32.totalorder %s168, %s169
      %p183 = scmp.eq.s32.totalorder %s25, 1
      %p184 = por %p182, %p183
      %p186 = scmp.ne.s32.totalorder %s169, %s185
      %p187 = scmp.eq.s32.totalorder %s25, 0
      %p188 = por %p186, %p187
      %p189 = scmp.le.s32.totalorder 1, %s19
      %p190 = scmp.lt.s32.totalorder %s19, 3
      %p191 = pnand %p189, %p190
      %p192 = pneg %p191
      // Predicated region
      $region9: #{tpu_custom_call.1} parent=5 // pred_check
        _
      $region10: #{tpu_custom_call.1} parent=5 // pred_check_branch
        %194 = sbr.rel (%p191) target = $region12
      $region11: #{tpu_custom_call.1} parent=5 // pred_region
        %s195 = ssub.s32 %s19, 1
        // Predicated region
        $region13: #{tpu_custom_call.1} parent=11 // pred_check
          %p196 = pneg %p66
        $region14: #{tpu_custom_call.1} parent=11 // pred_check_branch
          %198 = sbr.rel (%p196) target = $region16
        $region15: #{tpu_custom_call.1} parent=11 // pred_region
          _
        $region16: #{tpu_custom_call.1} parent=11 // pred_fallthru
          _
        // Predicated region
        $region17: #{tpu_custom_call.1} parent=11 // pred_check
          %p199 = pneg %p87
        $region18: #{tpu_custom_call.1} parent=11 // pred_check_branch
          %201 = sbr.rel (%p199) target = $region20
        $region19: #{tpu_custom_call.1} parent=11 // pred_region
          _
        $region20: #{tpu_custom_call.1} parent=11 // pred_fallthru
          _
        // Predicated region
        $region21: #{tpu_custom_call.1} parent=11 // pred_check
          %p202 = pneg %p108
        $region22: #{tpu_custom_call.1} parent=11 // pred_check_branch
          %204 = sbr.rel (%p202) target = $region24
        $region23: #{tpu_custom_call.1} parent=11 // pred_region
          _
        $region24: #{tpu_custom_call.1} parent=11 // pred_fallthru
          _
        // Predicated region
        $region25: #{tpu_custom_call.1} parent=11 // pred_check
          %p205 = pneg %p129
        $region26: #{tpu_custom_call.1} parent=11 // pred_check_branch
          %207 = sbr.rel (%p205) target = $region28
        $region27: #{tpu_custom_call.1} parent=11 // pred_region
          _
        $region28: #{tpu_custom_call.1} parent=11 // pred_fallthru
          _
      $region12: #{tpu_custom_call.1} parent=5 // pred_fallthru
        _
      %p208 = scmp.lt.s32.totalorder %s19, 2
      // Predicated region
      $region29: #{tpu_custom_call.1} parent=5 // pred_check
        %p209 = pneg %p208
      $region30: #{tpu_custom_call.1} parent=5 // pred_check_branch
        %211 = sbr.rel (%p209) target = $region32
      $region31: #{tpu_custom_call.1} parent=5 // pred_region
        // Predicated region
        $region33: #{tpu_custom_call.1} parent=31 // pred_check
          %p212 = pneg %p39
        $region34: #{tpu_custom_call.1} parent=31 // pred_check_branch
          %214 = sbr.rel (%p212) target = $region36
        $region35: #{tpu_custom_call.1} parent=31 // pred_region
          %s215 = smul.u32 4, %s19
          %p216 = scmp.lt.s32.totalorder %s215, 7
          %s217 = scalar_select %p216, %s215, 7
          %s218 = smul.addr %s217, 8
          %s219 = smul.addr %s218, 8
          %s220 = scalar_lea.vmem %s0, %s219
          %s221 = smul.u32 4, %s19
        $region36: #{tpu_custom_call.1} parent=31 // pred_fallthru
          _
      $region32: #{tpu_custom_call.1} parent=5 // pred_fallthru
        _
      %p222 = scmp.le.s32.totalorder 1, %s19
      %p223 = scmp.lt.s32.totalorder %s19, 3
      %p224 = pnand %p222, %p223
      %p225 = pneg %p224
      // Predicated region
      $region37: #{tpu_custom_call.1} parent=5 // pred_check
        _
      $region38: #{tpu_custom_call.1} parent=5 // pred_check_branch
        %227 = sbr.rel (%p224) target = $region40
      $region39: #{tpu_custom_call.1} parent=5 // pred_region
        %s228 = ssub.s32 %s19, 1
        %s229 = smul.u32 4, %s24
        %p230 = scmp.lt.s32.totalorder %s229, 7
        %s231 = scalar_select %p230, %s229, 7
        %s232 = smul.addr %s231, 8
        %s233 = smul.addr %s232, 8
        %s234 = scalar_lea.vmem %s0, %s233
        %p235 = pneg %p45
        %p236 = pneg %p42
        %p237 = pneg %p66
        %p238 = pneg %p63
        %p239 = pneg %p87
        %p240 = pneg %p84
        %p241 = pneg %p108
        %p242 = pneg %p105
        %p243 = pneg %p129
        %p244 = pneg %p126
        %p245 = pneg %p155
        %p246 = pneg %p152
        %s247 = sand.u32 %s142, 1
        %s248 = scalar_lea.sflag [#allocation3], %s247
        %s249 = sand.u32 %s142, 1
        %s250 = smul.addr %s249, 8
        %s251 = scalar_lea.vmem [#allocation2], %s250
        %p252 = pneg %p181
        %p253 = pneg %p178
        %s254 = sand.u32 %s168, 1
        %s255 = scalar_lea.sflag [#allocation5], %s254
        %s256 = sand.u32 %s168, 1
        %s257 = smul.addr %s256, 16
        %s258 = scalar_lea.vmem [#allocation4], %s257
        %s259 = smul.u32 4, %s24
        %p260 = scmp.lt.s32.totalorder %s259, 7
        %s261 = scalar_select %p260, %s259, 7
        %s262 = smul.addr %s261, 8
        %s263 = smul.addr %s262, 8
        %s264 = scalar_lea.vmem %s0, %s263
        %s265 = smul.u32 4, %s24
        %s266 = smul.u32 2, %s24
        %v267 = vld [vmem:[%s264] sm:$0xff]
        %v268 = vld [vmem:[%s264 + $0x8] sm:$0xff]
        %v269 = vld [vmem:[%s264 + $0x10] sm:$0xff]
        %v270 = vld [vmem:[%s264 + $0x18] sm:$0xff]
        %v271 = vld [vmem:[%s264 + $0x20] sm:$0xff]
        %v272 = vld [vmem:[%s264 + $0x28] sm:$0xff]
        %v273 = vld [vmem:[%s264 + $0x30] sm:$0xff]
        %v274 = vld [vmem:[%s264 + $0x38] sm:$0xff]
        %v275 = vld [vmem:[%s264 + $0x40] sm:$0xff]
        %v276 = vld [vmem:[%s264 + $0x48] sm:$0xff]
        %v277 = vld [vmem:[%s264 + $0x50] sm:$0xff]
        %v278 = vld [vmem:[%s264 + $0x58] sm:$0xff]
        %v279 = vld [vmem:[%s264 + $0x60] sm:$0xff]
        %v280 = vld [vmem:[%s264 + $0x68] sm:$0xff]
        %v281 = vld [vmem:[%s264 + $0x70] sm:$0xff]
        %v282 = vld [vmem:[%s264 + $0x78] sm:$0xff]
        %v283 = vld [vmem:[%s264 + $0x80] sm:$0xff]
        %v284 = vld [vmem:[%s264 + $0x88] sm:$0xff]
        %v285 = vld [vmem:[%s264 + $0x90] sm:$0xff]
        %v286 = vld [vmem:[%s264 + $0x98] sm:$0xff]
        %v287 = vld [vmem:[%s264 + $0xa0] sm:$0xff]
        %v288 = vld [vmem:[%s264 + $0xa8] sm:$0xff]
        %v289 = vld [vmem:[%s264 + $0xb0] sm:$0xff]
        %v290 = vld [vmem:[%s264 + $0xb8] sm:$0xff]
        %v291 = vld [vmem:[%s264 + $0xc0] sm:$0xff]
        %v292 = vld [vmem:[%s264 + $0xc8] sm:$0xff]
        %v293 = vld [vmem:[%s264 + $0xd0] sm:$0xff]
        %v294 = vld [vmem:[%s264 + $0xd8] sm:$0xff]
        %v295 = vld [vmem:[%s264 + $0xe0] sm:$0xff]
        %v296 = vld [vmem:[%s264 + $0xe8] sm:$0xff]
        %v297 = vld [vmem:[%s264 + $0xf0] sm:$0xff]
        %v298 = vld [vmem:[%s264 + $0xf8] sm:$0xff]
        %vm299 = vcmask 261120
        %v300 = vsel %vm299, %v267, 0.0
        %301 = vadd.xlane.f32.xlu0 %v300
        %v302 = vpop.xlane.xlu0 %301
        %v303 = vsel %vm299, %v268, 0.0
        %304 = vadd.xlane.f32.xlu0 %v303
        %v305 = vpop.xlane.xlu0 %304
        %v306 = vsel %vm299, %v269, 0.0
        %307 = vadd.xlane.f32.xlu0 %v306
        %v308 = vpop.xlane.xlu0 %307
        %v309 = vsel %vm299, %v270, 0.0
        %310 = vadd.xlane.f32.xlu0 %v309
        %v311 = vpop.xlane.xlu0 %310
        %v312 = vsel %vm299, %v271, 0.0
        %313 = vadd.xlane.f32.xlu0 %v312
        %v314 = vpop.xlane.xlu0 %313
        %v315 = vsel %vm299, %v272, 0.0
        %316 = vadd.xlane.f32.xlu0 %v315
        %v317 = vpop.xlane.xlu0 %316
        %v318 = vsel %vm299, %v273, 0.0
        %319 = vadd.xlane.f32.xlu0 %v318
        %v320 = vpop.xlane.xlu0 %319
        %v321 = vsel %vm299, %v274, 0.0
        %322 = vadd.xlane.f32.xlu0 %v321
        %v323 = vpop.xlane.xlu0 %322
        %v324 = vsel %vm299, %v275, 0.0
        %325 = vadd.xlane.f32.xlu0 %v324
        %v326 = vpop.xlane.xlu0 %325
        %v327 = vsel %vm299, %v276, 0.0
        %328 = vadd.xlane.f32.xlu0 %v327
        %v329 = vpop.xlane.xlu0 %328
        %v330 = vsel %vm299, %v277, 0.0
        %331 = vadd.xlane.f32.xlu0 %v330
        %v332 = vpop.xlane.xlu0 %331
        %v333 = vsel %vm299, %v278, 0.0
        %334 = vadd.xlane.f32.xlu0 %v333
        %v335 = vpop.xlane.xlu0 %334
        %v336 = vsel %vm299, %v279, 0.0
        %337 = vadd.xlane.f32.xlu0 %v336
        %v338 = vpop.xlane.xlu0 %337
        %v339 = vsel %vm299, %v280, 0.0
        %340 = vadd.xlane.f32.xlu0 %v339
        %v341 = vpop.xlane.xlu0 %340
        %v342 = vsel %vm299, %v281, 0.0
        %343 = vadd.xlane.f32.xlu0 %v342
        %v344 = vpop.xlane.xlu0 %343
        %v345 = vsel %vm299, %v282, 0.0
        %346 = vadd.xlane.f32.xlu0 %v345
        %v347 = vpop.xlane.xlu0 %346
        %v348 = vsel %vm299, %v283, 0.0
        %349 = vadd.xlane.f32.xlu0 %v348
        %v350 = vpop.xlane.xlu0 %349
        %v351 = vsel %vm299, %v284, 0.0
        %352 = vadd.xlane.f32.xlu0 %v351
        %v353 = vpop.xlane.xlu0 %352
        %v354 = vsel %vm299, %v285, 0.0
        %355 = vadd.xlane.f32.xlu0 %v354
        %v356 = vpop.xlane.xlu0 %355
        %v357 = vsel %vm299, %v286, 0.0
        %358 = vadd.xlane.f32.xlu0 %v357
        %v359 = vpop.xlane.xlu0 %358
        %v360 = vsel %vm299, %v287, 0.0
        %361 = vadd.xlane.f32.xlu0 %v360
        %v362 = vpop.xlane.xlu0 %361
        %v363 = vsel %vm299, %v288, 0.0
        %364 = vadd.xlane.f32.xlu0 %v363
        %v365 = vpop.xlane.xlu0 %364
        %v366 = vsel %vm299, %v289, 0.0
        %367 = vadd.xlane.f32.xlu0 %v366
        %v368 = vpop.xlane.xlu0 %367
        %v369 = vsel %vm299, %v290, 0.0
        %370 = vadd.xlane.f32.xlu0 %v369
        %v371 = vpop.xlane.xlu0 %370
        %v372 = vsel %vm299, %v291, 0.0
        %373 = vadd.xlane.f32.xlu0 %v372
        %v374 = vpop.xlane.xlu0 %373
        %v375 = vsel %vm299, %v292, 0.0
        %376 = vadd.xlane.f32.xlu0 %v375
        %v377 = vpop.xlane.xlu0 %376
        %v378 = vsel %vm299, %v293, 0.0
        %379 = vadd.xlane.f32.xlu0 %v378
        %v380 = vpop.xlane.xlu0 %379
        %v381 = vsel %vm299, %v294, 0.0
        %382 = vadd.xlane.f32.xlu0 %v381
        %v383 = vpop.xlane.xlu0 %382
        %v384 = vsel %vm299, %v295, 0.0
        %385 = vadd.xlane.f32.xlu0 %v384
        %v386 = vpop.xlane.xlu0 %385
        %v387 = vsel %vm299, %v296, 0.0
        %388 = vadd.xlane.f32.xlu0 %v387
        %v389 = vpop.xlane.xlu0 %388
        %v390 = vsel %vm299, %v297, 0.0
        %391 = vadd.xlane.f32.xlu0 %v390
        %v392 = vpop.xlane.xlu0 %391
        %v393 = vsel %vm299, %v298, 0.0
        %394 = vadd.xlane.f32.xlu0 %v393
        %v395 = vpop.xlane.xlu0 %394
        %v396 = vrcp.pop 32.0
        %v397 = vmul.f32 %v302, %v396
        %v398 = vmul.f32 %v305, %v396
        %v399 = vmul.f32 %v308, %v396
        %v400 = vmul.f32 %v311, %v396
        %v401 = vmul.f32 %v314, %v396
        %v402 = vmul.f32 %v317, %v396
        %v403 = vmul.f32 %v320, %v396
        %v404 = vmul.f32 %v323, %v396
        %v405 = vmul.f32 %v326, %v396
        %v406 = vmul.f32 %v329, %v396
        %v407 = vmul.f32 %v332, %v396
        %v408 = vmul.f32 %v335, %v396
        %v409 = vmul.f32 %v338, %v396
        %v410 = vmul.f32 %v341, %v396
        %v411 = vmul.f32 %v344, %v396
        %v412 = vmul.f32 %v347, %v396
        %v413 = vmul.f32 %v350, %v396
        %v414 = vmul.f32 %v353, %v396
        %v415 = vmul.f32 %v356, %v396
        %v416 = vmul.f32 %v359, %v396
        %v417 = vmul.f32 %v362, %v396
        %v418 = vmul.f32 %v365, %v396
        %v419 = vmul.f32 %v368, %v396
        %v420 = vmul.f32 %v371, %v396
        %v421 = vmul.f32 %v374, %v396
        %v422 = vmul.f32 %v377, %v396
        %v423 = vmul.f32 %v380, %v396
        %v424 = vmul.f32 %v383, %v396
        %v425 = vmul.f32 %v386, %v396
        %v426 = vmul.f32 %v389, %v396
        %v427 = vmul.f32 %v392, %v396
        %v428 = vmul.f32 %v395, %v396
        %v429 = vsub.f32 %v267, %v397
        %v430 = vsub.f32 %v268, %v398
        %v431 = vsub.f32 %v269, %v399
        %v432 = vsub.f32 %v270, %v400
        %v433 = vsub.f32 %v271, %v401
        %v434 = vsub.f32 %v272, %v402
        %v435 = vsub.f32 %v273, %v403
        %v436 = vsub.f32 %v274, %v404
        %v437 = vsub.f32 %v275, %v405
        %v438 = vsub.f32 %v276, %v406
        %v439 = vsub.f32 %v277, %v407
        %v440 = vsub.f32 %v278, %v408
        %v441 = vsub.f32 %v279, %v409
        %v442 = vsub.f32 %v280, %v410
        %v443 = vsub.f32 %v281, %v411
        %v444 = vsub.f32 %v282, %v412
        %v445 = vsub.f32 %v283, %v413
        %v446 = vsub.f32 %v284, %v414
        %v447 = vsub.f32 %v285, %v415
        %v448 = vsub.f32 %v286, %v416
        %v449 = vsub.f32 %v287, %v417
        %v450 = vsub.f32 %v288, %v418
        %v451 = vsub.f32 %v289, %v419
        %v452 = vsub.f32 %v290, %v420
        %v453 = vsub.f32 %v291, %v421
        %v454 = vsub.f32 %v292, %v422
        %v455 = vsub.f32 %v293, %v423
        %v456 = vsub.f32 %v294, %v424
        %v457 = vsub.f32 %v295, %v425
        %v458 = vsub.f32 %v296, %v426
        %v459 = vsub.f32 %v297, %v427
        %v460 = vsub.f32 %v298, %v428
        %v461 = vmul.f32 %v429, %v429
        %v462 = vmul.f32 %v430, %v430
        %v463 = vmul.f32 %v431, %v431
        %v464 = vmul.f32 %v432, %v432
        %v465 = vmul.f32 %v433, %v433
        %v466 = vmul.f32 %v434, %v434
        %v467 = vmul.f32 %v435, %v435
        %v468 = vmul.f32 %v436, %v436
        %v469 = vmul.f32 %v437, %v437
        %v470 = vmul.f32 %v438, %v438
        %v471 = vmul.f32 %v439, %v439
        %v472 = vmul.f32 %v440, %v440
        %v473 = vmul.f32 %v441, %v441
        %v474 = vmul.f32 %v442, %v442
        %v475 = vmul.f32 %v443, %v443
        %v476 = vmul.f32 %v444, %v444
        %v477 = vmul.f32 %v445, %v445
        %v478 = vmul.f32 %v446, %v446
        %v479 = vmul.f32 %v447, %v447
        %v480 = vmul.f32 %v448, %v448
        %v481 = vmul.f32 %v449, %v449
        %v482 = vmul.f32 %v450, %v450
        %v483 = vmul.f32 %v451, %v451
        %v484 = vmul.f32 %v452, %v452
        %v485 = vmul.f32 %v453, %v453
        %v486 = vmul.f32 %v454, %v454
        %v487 = vmul.f32 %v455, %v455
        %v488 = vmul.f32 %v456, %v456
        %v489 = vmul.f32 %v457, %v457
        %v490 = vmul.f32 %v458, %v458
        %v491 = vmul.f32 %v459, %v459
        %v492 = vmul.f32 %v460, %v460
        %v493 = vsel %vm299, %v461, 0.0
        %494 = vadd.xlane.f32.xlu0 %v493
        %v495 = vpop.xlane.xlu0 %494
        %v496 = vsel %vm299, %v462, 0.0
        %497 = vadd.xlane.f32.xlu0 %v496
        %v498 = vpop.xlane.xlu0 %497
        %v499 = vsel %vm299, %v463, 0.0
        %500 = vadd.xlane.f32.xlu0 %v499
        %v501 = vpop.xlane.xlu0 %500
        %v502 = vsel %vm299, %v464, 0.0
        %503 = vadd.xlane.f32.xlu0 %v502
        %v504 = vpop.xlane.xlu0 %503
        %v505 = vsel %vm299, %v465, 0.0
        %506 = vadd.xlane.f32.xlu0 %v505
        %v507 = vpop.xlane.xlu0 %506
        %v508 = vsel %vm299, %v466, 0.0
        %509 = vadd.xlane.f32.xlu0 %v508
        %v510 = vpop.xlane.xlu0 %509
        %v511 = vsel %vm299, %v467, 0.0
        %512 = vadd.xlane.f32.xlu0 %v511
        %v513 = vpop.xlane.xlu0 %512
        %v514 = vsel %vm299, %v468, 0.0
        %515 = vadd.xlane.f32.xlu0 %v514
        %v516 = vpop.xlane.xlu0 %515
        %v517 = vsel %vm299, %v469, 0.0
        %518 = vadd.xlane.f32.xlu0 %v517
        %v519 = vpop.xlane.xlu0 %518
        %v520 = vsel %vm299, %v470, 0.0
        %521 = vadd.xlane.f32.xlu0 %v520
        %v522 = vpop.xlane.xlu0 %521
        %v523 = vsel %vm299, %v471, 0.0
        %524 = vadd.xlane.f32.xlu0 %v523
        %v525 = vpop.xlane.xlu0 %524
        %v526 = vsel %vm299, %v472, 0.0
        %527 = vadd.xlane.f32.xlu0 %v526
        %v528 = vpop.xlane.xlu0 %527
        %v529 = vsel %vm299, %v473, 0.0
        %530 = vadd.xlane.f32.xlu0 %v529
        %v531 = vpop.xlane.xlu0 %530
        %v532 = vsel %vm299, %v474, 0.0
        %533 = vadd.xlane.f32.xlu0 %v532
        %v534 = vpop.xlane.xlu0 %533
        %v535 = vsel %vm299, %v475, 0.0
        %536 = vadd.xlane.f32.xlu0 %v535
        %v537 = vpop.xlane.xlu0 %536
        %v538 = vsel %vm299, %v476, 0.0
        %539 = vadd.xlane.f32.xlu0 %v538
        %v540 = vpop.xlane.xlu0 %539
        %v541 = vsel %vm299, %v477, 0.0
        %542 = vadd.xlane.f32.xlu0 %v541
        %v543 = vpop.xlane.xlu0 %542
        %v544 = vsel %vm299, %v478, 0.0
        %545 = vadd.xlane.f32.xlu0 %v544
        %v546 = vpop.xlane.xlu0 %545
        %v547 = vsel %vm299, %v479, 0.0
        %548 = vadd.xlane.f32.xlu0 %v547
        %v549 = vpop.xlane.xlu0 %548
        %v550 = vsel %vm299, %v480, 0.0
        %551 = vadd.xlane.f32.xlu0 %v550
        %v552 = vpop.xlane.xlu0 %551
        %v553 = vsel %vm299, %v481, 0.0
        %554 = vadd.xlane.f32.xlu0 %v553
        %v555 = vpop.xlane.xlu0 %554
        %v556 = vsel %vm299, %v482, 0.0
        %557 = vadd.xlane.f32.xlu0 %v556
        %v558 = vpop.xlane.xlu0 %557
        %v559 = vsel %vm299, %v483, 0.0
        %560 = vadd.xlane.f32.xlu0 %v559
        %v561 = vpop.xlane.xlu0 %560
        %v562 = vsel %vm299, %v484, 0.0
        %563 = vadd.xlane.f32.xlu0 %v562
        %v564 = vpop.xlane.xlu0 %563
        %v565 = vsel %vm299, %v485, 0.0
        %566 = vadd.xlane.f32.xlu0 %v565
        %v567 = vpop.xlane.xlu0 %566
        %v568 = vsel %vm299, %v486, 0.0
        %569 = vadd.xlane.f32.xlu0 %v568
        %v570 = vpop.xlane.xlu0 %569
        %v571 = vsel %vm299, %v487, 0.0
        %572 = vadd.xlane.f32.xlu0 %v571
        %v573 = vpop.xlane.xlu0 %572
        %v574 = vsel %vm299, %v488, 0.0
        %575 = vadd.xlane.f32.xlu0 %v574
        %v576 = vpop.xlane.xlu0 %575
        %v577 = vsel %vm299, %v489, 0.0
        %578 = vadd.xlane.f32.xlu0 %v577
        %v579 = vpop.xlane.xlu0 %578
        %v580 = vsel %vm299, %v490, 0.0
        %581 = vadd.xlane.f32.xlu0 %v580
        %v582 = vpop.xlane.xlu0 %581
        %v583 = vsel %vm299, %v491, 0.0
        %584 = vadd.xlane.f32.xlu0 %v583
        %v585 = vpop.xlane.xlu0 %584
        %v586 = vsel %vm299, %v492, 0.0
        %587 = vadd.xlane.f32.xlu0 %v586
        %v588 = vpop.xlane.xlu0 %587
        %v589 = vmul.f32 %v495, %v396
        %v590 = vmul.f32 %v498, %v396
        %v591 = vmul.f32 %v501, %v396
        %v592 = vmul.f32 %v504, %v396
        %v593 = vmul.f32 %v507, %v396
        %v594 = vmul.f32 %v510, %v396
        %v595 = vmul.f32 %v513, %v396
        %v596 = vmul.f32 %v516, %v396
        %v597 = vmul.f32 %v519, %v396
        %v598 = vmul.f32 %v522, %v396
        %v599 = vmul.f32 %v525, %v396
        %v600 = vmul.f32 %v528, %v396
        %v601 = vmul.f32 %v531, %v396
        %v602 = vmul.f32 %v534, %v396
        %v603 = vmul.f32 %v537, %v396
        %v604 = vmul.f32 %v540, %v396
        %v605 = vmul.f32 %v543, %v396
        %v606 = vmul.f32 %v546, %v396
        %v607 = vmul.f32 %v549, %v396
        %v608 = vmul.f32 %v552, %v396
        %v609 = vmul.f32 %v555, %v396
        %v610 = vmul.f32 %v558, %v396
        %v611 = vmul.f32 %v561, %v396
        %v612 = vmul.f32 %v564, %v396
        %v613 = vmul.f32 %v567, %v396
        %v614 = vmul.f32 %v570, %v396
        %v615 = vmul.f32 %v573, %v396
        %v616 = vmul.f32 %v576, %v396
        %v617 = vmul.f32 %v579, %v396
        %v618 = vmul.f32 %v582, %v396
        %v619 = vmul.f32 %v585, %v396
        %v620 = vmul.f32 %v588, %v396
        %v621 = vadd.f32 %v589, 1e-05
        %v622 = vadd.f32 %v590, 1e-05
        %v623 = vadd.f32 %v591, 1e-05
        %v624 = vadd.f32 %v592, 1e-05
        %v625 = vadd.f32 %v593, 1e-05
        %v626 = vadd.f32 %v594, 1e-05
        %v627 = vadd.f32 %v595, 1e-05
        %v628 = vadd.f32 %v596, 1e-05
        %v629 = vadd.f32 %v597, 1e-05
        %v630 = vadd.f32 %v598, 1e-05
        %v631 = vadd.f32 %v599, 1e-05
        %v632 = vadd.f32 %v600, 1e-05
        %v633 = vadd.f32 %v601, 1e-05
        %v634 = vadd.f32 %v602, 1e-05
        %v635 = vadd.f32 %v603, 1e-05
        %v636 = vadd.f32 %v604, 1e-05
        %v637 = vadd.f32 %v605, 1e-05
        %v638 = vadd.f32 %v606, 1e-05
        %v639 = vadd.f32 %v607, 1e-05
        %v640 = vadd.f32 %v608, 1e-05
        %v641 = vadd.f32 %v609, 1e-05
        %v642 = vadd.f32 %v610, 1e-05
        %v643 = vadd.f32 %v611, 1e-05
        %v644 = vadd.f32 %v612, 1e-05
        %v645 = vadd.f32 %v613, 1e-05
        %v646 = vadd.f32 %v614, 1e-05
        %v647 = vadd.f32 %v615, 1e-05
        %v648 = vadd.f32 %v616, 1e-05
        %v649 = vadd.f32 %v617, 1e-05
        %v650 = vadd.f32 %v618, 1e-05
        %v651 = vadd.f32 %v619, 1e-05
        %v652 = vadd.f32 %v620, 1e-05
        %v653 = vrsqrt.pop %v621
        %v654 = vrsqrt.pop %v622
        %v655 = vrsqrt.pop %v623
        %v656 = vrsqrt.pop %v624
        %v657 = vrsqrt.pop %v625
        %v658 = vrsqrt.pop %v626
        %v659 = vrsqrt.pop %v627
        %v660 = vrsqrt.pop %v628
        %v661 = vrsqrt.pop %v629
        %v662 = vrsqrt.pop %v630
        %v663 = vrsqrt.pop %v631
        %v664 = vrsqrt.pop %v632
        %v665 = vrsqrt.pop %v633
        %v666 = vrsqrt.pop %v634
        %v667 = vrsqrt.pop %v635
        %v668 = vrsqrt.pop %v636
        %v669 = vrsqrt.pop %v637
        %v670 = vrsqrt.pop %v638
        %v671 = vrsqrt.pop %v639
        %v672 = vrsqrt.pop %v640
        %v673 = vrsqrt.pop %v641
        %v674 = vrsqrt.pop %v642
        %v675 = vrsqrt.pop %v643
        %v676 = vrsqrt.pop %v644
        %v677 = vrsqrt.pop %v645
        %v678 = vrsqrt.pop %v646
        %v679 = vrsqrt.pop %v647
        %v680 = vrsqrt.pop %v648
        %v681 = vrsqrt.pop %v649
        %v682 = vrsqrt.pop %v650
        %v683 = vrsqrt.pop %v651
        %v684 = vrsqrt.pop %v652
        %v685 = vmul.f32 %v429, %v653
        %v686 = vmul.f32 %v430, %v654
        %v687 = vmul.f32 %v431, %v655
        %v688 = vmul.f32 %v432, %v656
        %v689 = vmul.f32 %v433, %v657
        %v690 = vmul.f32 %v434, %v658
        %v691 = vmul.f32 %v435, %v659
        %v692 = vmul.f32 %v436, %v660
        %v693 = vmul.f32 %v437, %v661
        %v694 = vmul.f32 %v438, %v662
        %v695 = vmul.f32 %v439, %v663
        %v696 = vmul.f32 %v440, %v664
        %v697 = vmul.f32 %v441, %v665
        %v698 = vmul.f32 %v442, %v666
        %v699 = vmul.f32 %v443, %v667
        %v700 = vmul.f32 %v444, %v668
        %v701 = vmul.f32 %v445, %v669
        %v702 = vmul.f32 %v446, %v670
        %v703 = vmul.f32 %v447, %v671
        %v704 = vmul.f32 %v448, %v672
        %v705 = vmul.f32 %v449, %v673
        %v706 = vmul.f32 %v450, %v674
        %v707 = vmul.f32 %v451, %v675
        %v708 = vmul.f32 %v452, %v676
        %v709 = vmul.f32 %v453, %v677
        %v710 = vmul.f32 %v454, %v678
        %v711 = vmul.f32 %v455, %v679
        %v712 = vmul.f32 %v456, %v680
        %v713 = vmul.f32 %v457, %v681
        %v714 = vmul.f32 %v458, %v682
        %v715 = vmul.f32 %v459, %v683
        %v716 = vmul.f32 %v460, %v684
        %v717 = vld [vmem:[%s1] sm:$0xff]
        %v718 = vld [vmem:[%s1 + $0x8] sm:$0xff]
        %v719 = vld [vmem:[%s1 + $0x10] sm:$0xff]
        %v720 = vld [vmem:[%s1 + $0x18] sm:$0xff]
        %v721 = vld [vmem:[%s2] sm:$0x1]
        %v723 = vlaneseq
        %v724 = vshrl.u32 %v723, 7
        %v725 = vsub.s32 0, %v724
        %v726 = vrot.slane %v721, %v725
        %v729 = vsel %vm299, %v685, 0
        %v732 = vsel %vm299, %v686, 0
        %v735 = vsel %vm299, %v687, 0
        %v738 = vsel %vm299, %v688, 0
        %v741 = vsel %vm299, %v689, 0
        %v744 = vsel %vm299, %v690, 0
        %v747 = vsel %vm299, %v691, 0
        %v750 = vsel %vm299, %v692, 0
        %v753 = vsel %vm299, %v693, 0
        %v756 = vsel %vm299, %v694, 0
        %v759 = vsel %vm299, %v695, 0
        %v762 = vsel %vm299, %v696, 0
        %v765 = vsel %vm299, %v697, 0
        %v768 = vsel %vm299, %v698, 0
        %v771 = vsel %vm299, %v699, 0
        %v774 = vsel %vm299, %v700, 0
        %v777 = vsel %vm299, %v701, 0
        %v780 = vsel %vm299, %v702, 0
        %v783 = vsel %vm299, %v703, 0
        %v786 = vsel %vm299, %v704, 0
        %v789 = vsel %vm299, %v705, 0
        %v792 = vsel %vm299, %v706, 0
        %v795 = vsel %vm299, %v707, 0
        %v798 = vsel %vm299, %v708, 0
        %v801 = vsel %vm299, %v709, 0
        %v804 = vsel %vm299, %v710, 0
        %v807 = vsel %vm299, %v711, 0
        %v810 = vsel %vm299, %v712, 0
        %v813 = vsel %vm299, %v713, 0
        %v816 = vsel %vm299, %v714, 0
        %v819 = vsel %vm299, %v715, 0
        %v822 = vsel %vm299, %v716, 0
        %824 = vmatprep.subr.mxu0 0.0
        %825 = vmatpush1.msra.mxu0 %v717
        %826 = vmatprep.subr.mxu0 0.0
        %827 = vmatpush1.msra.mxu0 %v718
        %828 = vmatprep.subr.mxu0 0.0
        %829 = vmatpush1.msra.mxu0 %v719
        %830 = vmatprep.subr.mxu0 0.0
        %831 = vmatpush1.msra.mxu0 %v720
        %832 = vmatprep.subr.mxu0 0.0
        %833 = vmatpush1.msra.mxu0 0.0
        %834 = vmatprep.subr.mxu0 0.0
        %835 = vmatpush1.msra.mxu0 0.0
        %836 = vmatprep.subr.mxu0 0.0
        %837 = vmatpush1.msra.mxu0 0.0
        %838 = vmatprep.subr.mxu0 0.0
        %839 = vmatpush1.msra.mxu0 0.0
        %840 = vmatprep.subr.mxu0 0.0
        %841 = vmatpush1.msra.mxu0 0.0
        %842 = vmatprep.subr.mxu0 0.0
        %843 = vmatpush1.msra.mxu0 0.0
        %844 = vmatprep.subr.mxu0 0.0
        %845 = vmatpush1.msra.mxu0 0.0
        %846 = vmatprep.subr.mxu0 0.0
        %847 = vmatpush1.msra.mxu0 0.0
        %848 = vmatprep.subr.mxu0 0.0
        %849 = vmatpush1.msra.mxu0 0.0
        %850 = vmatprep.subr.mxu0 0.0
        %851 = vmatpush1.msra.mxu0 0.0
        %852 = vmatprep.subr.mxu0 0.0
        %853 = vmatpush1.msra.mxu0 0.0
        %854 = vmatprep.subr.mxu0 0.0
        %855 = vmatpush1.msra.mxu0 0.0
        %856 = vmatprep.subr.mxu0 0.0
        %857 = vmatpush1.msra.mxu0 0.0
        %858 = vmatprep.subr.mxu0 0.0
        %859 = vmatpush1.msra.mxu0 0.0
        %860 = vmatprep.subr.mxu0 0.0
        %861 = vmatpush1.msra.mxu0 0.0
        %862 = vmatprep.subr.mxu0 0.0
        %863 = vmatpush1.msra.mxu0 0.0
        %864 = vmatprep.subr.mxu0 0.0
        %865 = vmatpush1.msra.mxu0 0.0
        %866 = vmatprep.subr.mxu0 0.0
        %867 = vmatpush1.msra.mxu0 0.0
        %868 = vmatprep.subr.mxu0 0.0
        %869 = vmatpush1.msra.mxu0 0.0
        %870 = vmatprep.subr.mxu0 0.0
        %871 = vmatpush1.msra.mxu0 0.0
        %872 = vmatprep.subr.mxu0 0.0
        %873 = vmatpush1.msra.mxu0 0.0
        %874 = vmatprep.subr.mxu0 0.0
        %875 = vmatpush1.msra.mxu0 0.0
        %876 = vmatprep.subr.mxu0 0.0
        %877 = vmatpush1.msra.mxu0 0.0
        %878 = vmatprep.subr.mxu0 0.0
        %879 = vmatpush1.msra.mxu0 0.0
        %880 = vmatprep.subr.mxu0 0.0
        %881 = vmatpush1.msra.mxu0 0.0
        %882 = vmatprep.subr.mxu0 0.0
        %883 = vmatpush1.msra.mxu0 0.0
        %884 = vmatprep.subr.mxu0 0.0
        %885 = vmatpush1.msra.mxu0 0.0
        %886 = vmatprep.subr.mxu0 0.0
        %887 = vmatpush1.msra.mxu0 0.0
        %888 = vmatprep.mubr.f32.mxu0 0.0
        %889 = vmatmul.mubr.f32.gmra.mrb[0].mxu0 %v729
        %v890 = vpop.f32.mrb[0].mxu0
        %v891 = vadd.f32 %v726, %v890
        %v892 = vpop.f32.mrb[0].mxu0
        %893 = vmatprep.mubr.f32.mxu0 0.0
        %894 = vmatmul.mubr.f32.gmra.mrb[0].mxu0 %v732
        %v895 = vpop.f32.mrb[0].mxu0
        %v896 = vadd.f32 %v726, %v895
        %v897 = vpop.f32.mrb[0].mxu0
        %898 = vmatprep.mubr.f32.mxu0 0.0
        %899 = vmatmul.mubr.f32.gmra.mrb[0].mxu0 %v735
        %v900 = vpop.f32.mrb[0].mxu0
        %v901 = vadd.f32 %v726, %v900
        %v902 = vpop.f32.mrb[0].mxu0
        %903 = vmatprep.mubr.f32.mxu0 0.0
        %904 = vmatmul.mubr.f32.gmra.mrb[0].mxu0 %v738
        %v905 = vpop.f32.mrb[0].mxu0
        %v906 = vadd.f32 %v726, %v905
        %v907 = vpop.f32.mrb[0].mxu0
        %908 = vmatprep.mubr.f32.mxu0 0.0
        %909 = vmatmul.mubr.f32.gmra.mrb[0].mxu0 %v741
        %v910 = vpop.f32.mrb[0].mxu0
        %v911 = vadd.f32 %v726, %v910
        %v912 = vpop.f32.mrb[0].mxu0
        %913 = vmatprep.mubr.f32.mxu0 0.0
        %914 = vmatmul.mubr.f32.gmra.mrb[0].mxu0 %v744
        %v915 = vpop.f32.mrb[0].mxu0
        %v916 = vadd.f32 %v726, %v915
        %v917 = vpop.f32.mrb[0].mxu0
        %918 = vmatprep.mubr.f32.mxu0 0.0
        %919 = vmatmul.mubr.f32.gmra.mrb[0].mxu0 %v747
        %v920 = vpop.f32.mrb[0].mxu0
        %v921 = vadd.f32 %v726, %v920
        %v922 = vpop.f32.mrb[0].mxu0
        %923 = vmatprep.mubr.f32.mxu0 0.0
        %924 = vmatmul.mubr.f32.gmra.mrb[0].mxu0 %v750
        %v925 = vpop.f32.mrb[0].mxu0
        %v926 = vadd.f32 %v726, %v925
        %v927 = vpop.f32.mrb[0].mxu0
        %928 = vmatprep.mubr.f32.mxu0 0.0
        %929 = vmatmul.mubr.f32.gmra.mrb[0].mxu0 %v753
        %v930 = vpop.f32.mrb[0].mxu0
        %v931 = vadd.f32 %v726, %v930
        %v932 = vpop.f32.mrb[0].mxu0
        %933 = vmatprep.mubr.f32.mxu0 0.0
        %934 = vmatmul.mubr.f32.gmra.mrb[0].mxu0 %v756
        %v935 = vpop.f32.mrb[0].mxu0
        %v936 = vadd.f32 %v726, %v935
        %v937 = vpop.f32.mrb[0].mxu0
        %938 = vmatprep.mubr.f32.mxu0 0.0
        %939 = vmatmul.mubr.f32.gmra.mrb[0].mxu0 %v759
        %v940 = vpop.f32.mrb[0].mxu0
        %v941 = vadd.f32 %v726, %v940
        %v942 = vpop.f32.mrb[0].mxu0
        %943 = vmatprep.mubr.f32.mxu0 0.0
        %944 = vmatmul.mubr.f32.gmra.mrb[0].mxu0 %v762
        %v945 = vpop.f32.mrb[0].mxu0
        %v946 = vadd.f32 %v726, %v945
        %v947 = vpop.f32.mrb[0].mxu0
        %948 = vmatprep.mubr.f32.mxu0 0.0
        %949 = vmatmul.mubr.f32.gmra.mrb[0].mxu0 %v765
        %v950 = vpop.f32.mrb[0].mxu0
        %v951 = vadd.f32 %v726, %v950
        %v952 = vpop.f32.mrb[0].mxu0
        %953 = vmatprep.mubr.f32.mxu0 0.0
        %954 = vmatmul.mubr.f32.gmra.mrb[0].mxu0 %v768
        %v955 = vpop.f32.mrb[0].mxu0
        %v956 = vadd.f32 %v726, %v955
        %v957 = vpop.f32.mrb[0].mxu0
        %958 = vmatprep.mubr.f32.mxu0 0.0
        %959 = vmatmul.mubr.f32.gmra.mrb[0].mxu0 %v771
        %v960 = vpop.f32.mrb[0].mxu0
        %v961 = vadd.f32 %v726, %v960
        %v962 = vpop.f32.mrb[0].mxu0
        %963 = vmatprep.mubr.f32.mxu0 0.0
        %964 = vmatmul.mubr.f32.gmra.mrb[0].mxu0 %v774
        %v965 = vpop.f32.mrb[0].mxu0
        %v966 = vadd.f32 %v726, %v965
        %v967 = vpop.f32.mrb[0].mxu0
        %968 = vmatprep.mubr.f32.mxu0 0.0
        %969 = vmatmul.mubr.f32.gmra.mrb[0].mxu0 %v777
        %v970 = vpop.f32.mrb[0].mxu0
        %v971 = vadd.f32 %v726, %v970
        %v972 = vpop.f32.mrb[0].mxu0
        %973 = vmatprep.mubr.f32.mxu0 0.0
        %974 = vmatmul.mubr.f32.gmra.mrb[0].mxu0 %v780
        %v975 = vpop.f32.mrb[0].mxu0
        %v976 = vadd.f32 %v726, %v975
        %v977 = vpop.f32.mrb[0].mxu0
        %978 = vmatprep.mubr.f32.mxu0 0.0
        %979 = vmatmul.mubr.f32.gmra.mrb[0].mxu0 %v783
        %v980 = vpop.f32.mrb[0].mxu0
        %v981 = vadd.f32 %v726, %v980
        %v982 = vpop.f32.mrb[0].mxu0
        %983 = vmatprep.mubr.f32.mxu0 0.0
        %984 = vmatmul.mubr.f32.gmra.mrb[0].mxu0 %v786
        %v985 = vpop.f32.mrb[0].mxu0
        %v986 = vadd.f32 %v726, %v985
        %v987 = vpop.f32.mrb[0].mxu0
        %988 = vmatprep.mubr.f32.mxu0 0.0
        %989 = vmatmul.mubr.f32.gmra.mrb[0].mxu0 %v789
        %v990 = vpop.f32.mrb[0].mxu0
        %v991 = vadd.f32 %v726, %v990
        %v992 = vpop.f32.mrb[0].mxu0
        %993 = vmatprep.mubr.f32.mxu0 0.0
        %994 = vmatmul.mubr.f32.gmra.mrb[0].mxu0 %v792
        %v995 = vpop.f32.mrb[0].mxu0
        %v996 = vadd.f32 %v726, %v995
        %v997 = vpop.f32.mrb[0].mxu0
        %998 = vmatprep.mubr.f32.mxu0 0.0
        %999 = vmatmul.mubr.f32.gmra.mrb[0].mxu0 %v795
        %v1000 = vpop.f32.mrb[0].mxu0
        %v1001 = vadd.f32 %v726, %v1000
        %v1002 = vpop.f32.mrb[0].mxu0
        %1003 = vmatprep.mubr.f32.mxu0 0.0
        %1004 = vmatmul.mubr.f32.gmra.mrb[0].mxu0 %v798
        %v1005 = vpop.f32.mrb[0].mxu0
        %v1006 = vadd.f32 %v726, %v1005
        %v1007 = vpop.f32.mrb[0].mxu0
        %1008 = vmatprep.mubr.f32.mxu0 0.0
        %1009 = vmatmul.mubr.f32.gmra.mrb[0].mxu0 %v801
        %v1010 = vpop.f32.mrb[0].mxu0
        %v1011 = vadd.f32 %v726, %v1010
        %v1012 = vpop.f32.mrb[0].mxu0
        %1013 = vmatprep.mubr.f32.mxu0 0.0
        %1014 = vmatmul.mubr.f32.gmra.mrb[0].mxu0 %v804
        %v1015 = vpop.f32.mrb[0].mxu0
        %v1016 = vadd.f32 %v726, %v1015
        %v1017 = vpop.f32.mrb[0].mxu0
        %1018 = vmatprep.mubr.f32.mxu0 0.0
        %1019 = vmatmul.mubr.f32.gmra.mrb[0].mxu0 %v807
        %v1020 = vpop.f32.mrb[0].mxu0
        %v1021 = vadd.f32 %v726, %v1020
        %v1022 = vpop.f32.mrb[0].mxu0
        %1023 = vmatprep.mubr.f32.mxu0 0.0
        %1024 = vmatmul.mubr.f32.gmra.mrb[0].mxu0 %v810
        %v1025 = vpop.f32.mrb[0].mxu0
        %v1026 = vadd.f32 %v726, %v1025
        %v1027 = vpop.f32.mrb[0].mxu0
        %1028 = vmatprep.mubr.f32.mxu0 0.0
        %1029 = vmatmul.mubr.f32.gmra.mrb[0].mxu0 %v813
        %v1030 = vpop.f32.mrb[0].mxu0
        %v1031 = vadd.f32 %v726, %v1030
        %v1032 = vpop.f32.mrb[0].mxu0
        %1033 = vmatprep.mubr.f32.mxu0 0.0
        %1034 = vmatmul.mubr.f32.gmra.mrb[0].mxu0 %v816
        %v1035 = vpop.f32.mrb[0].mxu0
        %v1036 = vadd.f32 %v726, %v1035
        %v1037 = vpop.f32.mrb[0].mxu0
        %1038 = vmatprep.mubr.f32.mxu0 0.0
        %1039 = vmatmul.mubr.f32.gmra.mrb[0].mxu0 %v819
        %v1040 = vpop.f32.mrb[0].mxu0
        %v1041 = vadd.f32 %v726, %v1040
        %v1042 = vpop.f32.mrb[0].mxu0
        %1043 = vmatprep.mubr.f32.mxu0 0.0
        %1044 = vmatmul.mubr.f32.gmra.mrb[0].mxu0 %v822
        %v1045 = vpop.f32.mrb[0].mxu0
        %v1046 = vadd.f32 %v726, %v1045
        %v1047 = vpop.f32.mrb[0].mxu0
        %1048 = vdwg.mxu0
        %v1049 = vmul.f32 %v891, 0.5
        %v1050 = vmul.f32 %v896, 0.5
        %v1051 = vmul.f32 %v901, 0.5
        %v1052 = vmul.f32 %v906, 0.5
        %v1053 = vmul.f32 %v911, 0.5
        %v1054 = vmul.f32 %v916, 0.5
        %v1055 = vmul.f32 %v921, 0.5
        %v1056 = vmul.f32 %v926, 0.5
        %v1057 = vmul.f32 %v931, 0.5
        %v1058 = vmul.f32 %v936, 0.5
        %v1059 = vmul.f32 %v941, 0.5
        %v1060 = vmul.f32 %v946, 0.5
        %v1061 = vmul.f32 %v951, 0.5
        %v1062 = vmul.f32 %v956, 0.5
        %v1063 = vmul.f32 %v961, 0.5
        %v1064 = vmul.f32 %v966, 0.5
        %v1065 = vmul.f32 %v971, 0.5
        %v1066 = vmul.f32 %v976, 0.5
        %v1067 = vmul.f32 %v981, 0.5
        %v1068 = vmul.f32 %v986, 0.5
        %v1069 = vmul.f32 %v991, 0.5
        %v1070 = vmul.f32 %v996, 0.5
        %v1071 = vmul.f32 %v1001, 0.5
        %v1072 = vmul.f32 %v1006, 0.5
        %v1073 = vmul.f32 %v1011, 0.5
        %v1074 = vmul.f32 %v1016, 0.5
        %v1075 = vmul.f32 %v1021, 0.5
        %v1076 = vmul.f32 %v1026, 0.5
        %v1077 = vmul.f32 %v1031, 0.5
        %v1078 = vmul.f32 %v1036, 0.5
        %v1079 = vmul.f32 %v1041, 0.5
        %v1080 = vmul.f32 %v1046, 0.5
        %v1081 = vmul.f32 %v891, 0.70710677
        %v1082 = vmul.f32 %v896, 0.70710677
        %v1083 = vmul.f32 %v901, 0.70710677
        %v1084 = vmul.f32 %v906, 0.70710677
        %v1085 = vmul.f32 %v911, 0.70710677
        %v1086 = vmul.f32 %v916, 0.70710677
        %v1087 = vmul.f32 %v921, 0.70710677
        %v1088 = vmul.f32 %v926, 0.70710677
        %v1089 = vmul.f32 %v931, 0.70710677
        %v1090 = vmul.f32 %v936, 0.70710677
        %v1091 = vmul.f32 %v941, 0.70710677
        %v1092 = vmul.f32 %v946, 0.70710677
        %v1093 = vmul.f32 %v951, 0.70710677
        %v1094 = vmul.f32 %v956, 0.70710677
        %v1095 = vmul.f32 %v961, 0.70710677
        %v1096 = vmul.f32 %v966, 0.70710677
        %v1097 = vmul.f32 %v971, 0.70710677
        %v1098 = vmul.f32 %v976, 0.70710677
        %v1099 = vmul.f32 %v981, 0.70710677
        %v1100 = vmul.f32 %v986, 0.70710677
        %v1101 = vmul.f32 %v991, 0.70710677
        %v1102 = vmul.f32 %v996, 0.70710677
        %v1103 = vmul.f32 %v1001, 0.70710677
        %v1104 = vmul.f32 %v1006, 0.70710677
        %v1105 = vmul.f32 %v1011, 0.70710677
        %v1106 = vmul.f32 %v1016, 0.70710677
        %v1107 = vmul.f32 %v1021, 0.70710677
        %v1108 = vmul.f32 %v1026, 0.70710677
        %v1109 = vmul.f32 %v1031, 0.70710677
        %v1110 = vmul.f32 %v1036, 0.70710677
        %v1111 = vmul.f32 %v1041, 0.70710677
        %v1112 = vmul.f32 %v1046, 0.70710677
        %v1113 = verf.f32.pop %v1081
        %v1114 = verf.f32.pop %v1082
        %v1115 = verf.f32.pop %v1083
        %v1116 = verf.f32.pop %v1084
        %v1117 = verf.f32.pop %v1085
        %v1118 = verf.f32.pop %v1086
        %v1119 = verf.f32.pop %v1087
        %v1120 = verf.f32.pop %v1088
        %v1121 = verf.f32.pop %v1089
        %v1122 = verf.f32.pop %v1090
        %v1123 = verf.f32.pop %v1091
        %v1124 = verf.f32.pop %v1092
        %v1125 = verf.f32.pop %v1093
        %v1126 = verf.f32.pop %v1094
        %v1127 = verf.f32.pop %v1095
        %v1128 = verf.f32.pop %v1096
        %v1129 = verf.f32.pop %v1097
        %v1130 = verf.f32.pop %v1098
        %v1131 = verf.f32.pop %v1099
        %v1132 = verf.f32.pop %v1100
        %v1133 = verf.f32.pop %v1101
        %v1134 = verf.f32.pop %v1102
        %v1135 = verf.f32.pop %v1103
        %v1136 = verf.f32.pop %v1104
        %v1137 = verf.f32.pop %v1105
        %v1138 = verf.f32.pop %v1106
        %v1139 = verf.f32.pop %v1107
        %v1140 = verf.f32.pop %v1108
        %v1141 = verf.f32.pop %v1109
        %v1142 = verf.f32.pop %v1110
        %v1143 = verf.f32.pop %v1111
        %v1144 = verf.f32.pop %v1112
        %v1145 = vadd.f32 %v1113, 1.0
        %v1146 = vadd.f32 %v1114, 1.0
        %v1147 = vadd.f32 %v1115, 1.0
        %v1148 = vadd.f32 %v1116, 1.0
        %v1149 = vadd.f32 %v1117, 1.0
        %v1150 = vadd.f32 %v1118, 1.0
        %v1151 = vadd.f32 %v1119, 1.0
        %v1152 = vadd.f32 %v1120, 1.0
        %v1153 = vadd.f32 %v1121, 1.0
        %v1154 = vadd.f32 %v1122, 1.0
        %v1155 = vadd.f32 %v1123, 1.0
        %v1156 = vadd.f32 %v1124, 1.0
        %v1157 = vadd.f32 %v1125, 1.0
        %v1158 = vadd.f32 %v1126, 1.0
        %v1159 = vadd.f32 %v1127, 1.0
        %v1160 = vadd.f32 %v1128, 1.0
        %v1161 = vadd.f32 %v1129, 1.0
        %v1162 = vadd.f32 %v1130, 1.0
        %v1163 = vadd.f32 %v1131, 1.0
        %v1164 = vadd.f32 %v1132, 1.0
        %v1165 = vadd.f32 %v1133, 1.0
        %v1166 = vadd.f32 %v1134, 1.0
        %v1167 = vadd.f32 %v1135, 1.0
        %v1168 = vadd.f32 %v1136, 1.0
        %v1169 = vadd.f32 %v1137, 1.0
        %v1170 = vadd.f32 %v1138, 1.0
        %v1171 = vadd.f32 %v1139, 1.0
        %v1172 = vadd.f32 %v1140, 1.0
        %v1173 = vadd.f32 %v1141, 1.0
        %v1174 = vadd.f32 %v1142, 1.0
        %v1175 = vadd.f32 %v1143, 1.0
        %v1176 = vadd.f32 %v1144, 1.0
        %v1177 = vmul.f32 %v1049, %v1145
        %v1178 = vmul.f32 %v1050, %v1146
        %v1179 = vmul.f32 %v1051, %v1147
        %v1180 = vmul.f32 %v1052, %v1148
        %v1181 = vmul.f32 %v1053, %v1149
        %v1182 = vmul.f32 %v1054, %v1150
        %v1183 = vmul.f32 %v1055, %v1151
        %v1184 = vmul.f32 %v1056, %v1152
        %v1185 = vmul.f32 %v1057, %v1153
        %v1186 = vmul.f32 %v1058, %v1154
        %v1187 = vmul.f32 %v1059, %v1155
        %v1188 = vmul.f32 %v1060, %v1156
        %v1189 = vmul.f32 %v1061, %v1157
        %v1190 = vmul.f32 %v1062, %v1158
        %v1191 = vmul.f32 %v1063, %v1159
        %v1192 = vmul.f32 %v1064, %v1160
        %v1193 = vmul.f32 %v1065, %v1161
        %v1194 = vmul.f32 %v1066, %v1162
        %v1195 = vmul.f32 %v1067, %v1163
        %v1196 = vmul.f32 %v1068, %v1164
        %v1197 = vmul.f32 %v1069, %v1165
        %v1198 = vmul.f32 %v1070, %v1166
        %v1199 = vmul.f32 %v1071, %v1167
        %v1200 = vmul.f32 %v1072, %v1168
        %v1201 = vmul.f32 %v1073, %v1169
        %v1202 = vmul.f32 %v1074, %v1170
        %v1203 = vmul.f32 %v1075, %v1171
        %v1204 = vmul.f32 %v1076, %v1172
        %v1205 = vmul.f32 %v1077, %v1173
        %v1206 = vmul.f32 %v1078, %v1174
        %v1207 = vmul.f32 %v1079, %v1175
        %v1208 = vmul.f32 %v1080, %v1176
        %v1209 = vld [vmem:[%s3] sm:$0xff]
        %v1210 = vld [vmem:[%s4] sm:$0xff]
        %1212 = vset.pattern.permute.xlu0 0
        %1213 = vperm.xlu0 %1212, %v1210
        %v1214 = vpop.permute.xlu0 %1213
        %vm1216 = vcmask 523264
        %v1218 = vsel %vm1216, %v1209, 0
        %v1221 = vsel %vm1216, %v1177, 0
        %v1224 = vsel %vm1216, %v1178, 0
        %v1227 = vsel %vm1216, %v1179, 0
        %v1230 = vsel %vm1216, %v1180, 0
        %v1233 = vsel %vm1216, %v1181, 0
        %v1236 = vsel %vm1216, %v1182, 0
        %v1239 = vsel %vm1216, %v1183, 0
        %v1242 = vsel %vm1216, %v1184, 0
        %v1245 = vsel %vm1216, %v1185, 0
        %v1248 = vsel %vm1216, %v1186, 0
        %v1251 = vsel %vm1216, %v1187, 0
        %v1254 = vsel %vm1216, %v1188, 0
        %v1257 = vsel %vm1216, %v1189, 0
        %v1260 = vsel %vm1216, %v1190, 0
        %v1263 = vsel %vm1216, %v1191, 0
        %v1266 = vsel %vm1216, %v1192, 0
        %v1269 = vsel %vm1216, %v1193, 0
        %v1272 = vsel %vm1216, %v1194, 0
        %v1275 = vsel %vm1216, %v1195, 0
        %v1278 = vsel %vm1216, %v1196, 0
        %v1281 = vsel %vm1216, %v1197, 0
        %v1284 = vsel %vm1216, %v1198, 0
        %v1287 = vsel %vm1216, %v1199, 0
        %v1290 = vsel %vm1216, %v1200, 0
        %v1293 = vsel %vm1216, %v1201, 0
        %v1296 = vsel %vm1216, %v1202, 0
        %v1299 = vsel %vm1216, %v1203, 0
        %v1302 = vsel %vm1216, %v1204, 0
        %v1305 = vsel %vm1216, %v1205, 0
        %v1308 = vsel %vm1216, %v1206, 0
        %v1311 = vsel %vm1216, %v1207, 0
        %v1314 = vsel %vm1216, %v1208, 0
        %1316 = vmatprep.subr.mxu0 0.0
        %1317 = vmatpush1.xpose.msra.mxu0 %v1221
        %1318 = vmatprep.subr.mxu0 0.0
        %1319 = vmatpush1.xpose.msra.mxu0 %v1224
        %1320 = vmatprep.subr.mxu0 0.0
        %1321 = vmatpush1.xpose.msra.mxu0 %v1227
        %1322 = vmatprep.subr.mxu0 0.0
        %1323 = vmatpush1.xpose.msra.mxu0 %v1230
        %1324 = vmatprep.subr.mxu0 0.0
        %1325 = vmatpush1.xpose.msra.mxu0 %v1233
        %1326 = vmatprep.subr.mxu0 0.0
        %1327 = vmatpush1.xpose.msra.mxu0 %v1236
        %1328 = vmatprep.subr.mxu0 0.0
        %1329 = vmatpush1.xpose.msra.mxu0 %v1239
        %1330 = vmatprep.subr.mxu0 0.0
        %1331 = vmatpush1.xpose.msra.mxu0 %v1242
        %1332 = vmatprep.subr.mxu0 0.0
        %1333 = vmatpush1.xpose.msra.mxu0 %v1245
        %1334 = vmatprep.subr.mxu0 0.0
        %1335 = vmatpush1.xpose.msra.mxu0 %v1248
        %1336 = vmatprep.subr.mxu0 0.0
        %1337 = vmatpush1.xpose.msra.mxu0 %v1251
        %1338 = vmatprep.subr.mxu0 0.0
        %1339 = vmatpush1.xpose.msra.mxu0 %v1254
        %1340 = vmatprep.subr.mxu0 0.0
        %1341 = vmatpush1.xpose.msra.mxu0 %v1257
        %1342 = vmatprep.subr.mxu0 0.0
        %1343 = vmatpush1.xpose.msra.mxu0 %v1260
        %1344 = vmatprep.subr.mxu0 0.0
        %1345 = vmatpush1.xpose.msra.mxu0 %v1263
        %1346 = vmatprep.subr.mxu0 0.0
        %1347 = vmatpush1.xpose.msra.mxu0 %v1266
        %1348 = vmatprep.subr.mxu0 0.0
        %1349 = vmatpush1.xpose.msra.mxu0 %v1269
        %1350 = vmatprep.subr.mxu0 0.0
        %1351 = vmatpush1.xpose.msra.mxu0 %v1272
        %1352 = vmatprep.subr.mxu0 0.0
        %1353 = vmatpush1.xpose.msra.mxu0 %v1275
        %1354 = vmatprep.subr.mxu0 0.0
        %1355 = vmatpush1.xpose.msra.mxu0 %v1278
        %1356 = vmatprep.subr.mxu0 0.0
        %1357 = vmatpush1.xpose.msra.mxu0 %v1281
        %1358 = vmatprep.subr.mxu0 0.0
        %1359 = vmatpush1.xpose.msra.mxu0 %v1284
        %1360 = vmatprep.subr.mxu0 0.0
        %1361 = vmatpush1.xpose.msra.mxu0 %v1287
        %1362 = vmatprep.subr.mxu0 0.0
        %1363 = vmatpush1.xpose.msra.mxu0 %v1290
        %1364 = vmatprep.subr.mxu0 0.0
        %1365 = vmatpush1.xpose.msra.mxu0 %v1293
        %1366 = vmatprep.subr.mxu0 0.0
        %1367 = vmatpush1.xpose.msra.mxu0 %v1296
        %1368 = vmatprep.subr.mxu0 0.0
        %1369 = vmatpush1.xpose.msra.mxu0 %v1299
        %1370 = vmatprep.subr.mxu0 0.0
        %1371 = vmatpush1.xpose.msra.mxu0 %v1302
        %1372 = vmatprep.subr.mxu0 0.0
        %1373 = vmatpush1.xpose.msra.mxu0 %v1305
        %1374 = vmatprep.subr.mxu0 0.0
        %1375 = vmatpush1.xpose.msra.mxu0 %v1308
        %1376 = vmatprep.subr.mxu0 0.0
        %1377 = vmatpush1.xpose.msra.mxu0 %v1311
        %1378 = vmatprep.subr.mxu0 0.0
        %1379 = vmatpush1.xpose.msra.mxu0 %v1314
        %1380 = vmatprep.mubr.f32.mxu0 0.0
        %1381 = vmatmul.mubr.f32.gmra.mrb[0].mxu0 %v1218
        %v1382 = vpop.f32.mrb[0].mxu0
        %v1383 = vadd.f32 %v1214, %v1382
        %v1384 = vpop.f32.mrb[0].mxu0
        %v1385 = vadd.f32 %v1214, %v1384
        %1386 = vdwg.mxu0
        %v1387 = vsel %vm1216, %v1383, -inf
        %1388 = vmax.xlane.f32.xlu0 %v1387
        %v1389 = vpop.xlane.xlu0 %1388
        %v1390 = vsub.f32 %v1383, %v1389
        %v1391 = vmul.f32 %v1390, 1.442695
        %v1392 = vpow.pop %v1391
        %v1393 = vsel %vm1216, %v1392, 0.0
        %1394 = vadd.xlane.f32.xlu0 %v1393
        %v1395 = vpop.xlane.xlu0 %1394
        %v1396 = vrcp.pop %v1395
        %v1397 = vmul.f32 %v1395, %v1396
        %v1398 = vsub.f32 2.0, %v1397
        %v1399 = vmul.f32 %v1396, %v1398
        %v1400 = vmul.f32 %v1392, %v1399
        %v1402 = vsel %vm1216, %v1400, 0
        %1404 = vmatprep.subr.mxu0 0.0
        %1405 = vmatpush1.msra.mxu0 %v267
        %1406 = vmatprep.subr.mxu0 0.0
        %1407 = vmatpush1.msra.mxu0 %v268
        %1408 = vmatprep.subr.mxu0 0.0
        %1409 = vmatpush1.msra.mxu0 %v269
        %1410 = vmatprep.subr.mxu0 0.0
        %1411 = vmatpush1.msra.mxu0 %v270
        %1412 = vmatprep.subr.mxu0 0.0
        %1413 = vmatpush1.msra.mxu0 %v271
        %1414 = vmatprep.subr.mxu0 0.0
        %1415 = vmatpush1.msra.mxu0 %v272
        %1416 = vmatprep.subr.mxu0 0.0
        %1417 = vmatpush1.msra.mxu0 %v273
        %1418 = vmatprep.subr.mxu0 0.0
        %1419 = vmatpush1.msra.mxu0 %v274
        %1420 = vmatprep.subr.mxu0 0.0
        %1421 = vmatpush1.msra.mxu0 0.0
        %1422 = vmatprep.subr.mxu0 0.0
        %1423 = vmatpush1.msra.mxu0 0.0
        %1424 = vmatprep.subr.mxu0 0.0
        %1425 = vmatpush1.msra.mxu0 0.0
        %1426 = vmatprep.subr.mxu0 0.0
        %1427 = vmatpush1.msra.mxu0 0.0
        %1428 = vmatprep.subr.mxu0 0.0
        %1429 = vmatpush1.msra.mxu0 0.0
        %1430 = vmatprep.subr.mxu0 0.0
        %1431 = vmatpush1.msra.mxu0 0.0
        %1432 = vmatprep.subr.mxu0 0.0
        %1433 = vmatpush1.msra.mxu0 0.0
        %1434 = vmatprep.subr.mxu0 0.0
        %1435 = vmatpush1.msra.mxu0 0.0
        %1436 = vmatprep.subr.mxu0 0.0
        %1437 = vmatpush1.msra.mxu0 0.0
        %1438 = vmatprep.subr.mxu0 0.0
        %1439 = vmatpush1.msra.mxu0 0.0
        %1440 = vmatprep.subr.mxu0 0.0
        %1441 = vmatpush1.msra.mxu0 0.0
        %1442 = vmatprep.subr.mxu0 0.0
        %1443 = vmatpush1.msra.mxu0 0.0
        %1444 = vmatprep.subr.mxu0 0.0
        %1445 = vmatpush1.msra.mxu0 0.0
        %1446 = vmatprep.subr.mxu0 0.0
        %1447 = vmatpush1.msra.mxu0 0.0
        %1448 = vmatprep.subr.mxu0 0.0
        %1449 = vmatpush1.msra.mxu0 0.0
        %1450 = vmatprep.subr.mxu0 0.0
        %1451 = vmatpush1.msra.mxu0 0.0
        %1452 = vmatprep.subr.mxu0 0.0
        %1453 = vmatpush1.msra.mxu0 0.0
        %1454 = vmatprep.subr.mxu0 0.0
        %1455 = vmatpush1.msra.mxu0 0.0
        %1456 = vmatprep.subr.mxu0 0.0
        %1457 = vmatpush1.msra.mxu0 0.0
        %1458 = vmatprep.subr.mxu0 0.0
        %1459 = vmatpush1.msra.mxu0 0.0
        %1460 = vmatprep.subr.mxu0 0.0
        %1461 = vmatpush1.msra.mxu0 0.0
        %1462 = vmatprep.subr.mxu0 0.0
        %1463 = vmatpush1.msra.mxu0 0.0
        %1464 = vmatprep.subr.mxu0 0.0
        %1465 = vmatpush1.msra.mxu0 0.0
        %1466 = vmatprep.subr.mxu0 0.0
        %1467 = vmatpush1.msra.mxu0 0.0
        %1468 = vmatprep.mubr.f32.mxu0 0.0
        %1469 = vmatmul.mubr.f32.gmra.mrb[0].mxu0 %v1402
        %v1470 = vpop.f32.mrb[0].mxu0
        %v1471 = vadd.f32 0.0, %v1470
        %v1472 = vpop.f32.mrb[0].mxu0
        %1473 = vdwg.mxu0
        %vm1474 = vcmask 1048064
        %v1475 = vsel %vm1474, %v1383, -inf
        %1476 = vmax.xlane.f32.xlu0 %v1475
        %v1477 = vpop.xlane.xlu0 %1476
        %v1478 = vsub.f32 %v1383, %v1477
        %v1479 = vmul.f32 %v1478, 1.442695
        %v1480 = vpow.pop %v1479
        %1482 = vrot.lane.b32.xlu0 %v1480, 64
        %v1483 = vpop.permute.xlu0 %1482
        %v1485 = vsel %vm1216, %v1483, 0.0
        %1486 = vadd.xlane.f32.xlu0 %v1485
        %v1487 = vpop.xlane.xlu0 %1486
        %v1488 = vrcp.pop %v1487
        %v1489 = vmul.f32 %v1487, %v1488
        %v1490 = vsub.f32 2.0, %v1489
        %v1491 = vmul.f32 %v1488, %v1490
        %v1492 = vmul.f32 %v1480, %v1491
        %1494 = vrot.lane.b32.xlu0 %v1492, 64
        %v1495 = vpop.permute.xlu0 %1494
        %v1496 = vsel %vm1216, %v1495, 0
        %1498 = vmatprep.subr.mxu0 0.0
        %1499 = vmatpush1.msra.mxu0 %v275
        %1500 = vmatprep.subr.mxu0 0.0
        %1501 = vmatpush1.msra.mxu0 %v276
        %1502 = vmatprep.subr.mxu0 0.0
        %1503 = vmatpush1.msra.mxu0 %v277
        %1504 = vmatprep.subr.mxu0 0.0
        %1505 = vmatpush1.msra.mxu0 %v278
        %1506 = vmatprep.subr.mxu0 0.0
        %1507 = vmatpush1.msra.mxu0 %v279
        %1508 = vmatprep.subr.mxu0 0.0
        %1509 = vmatpush1.msra.mxu0 %v280
        %1510 = vmatprep.subr.mxu0 0.0
        %1511 = vmatpush1.msra.mxu0 %v281
        %1512 = vmatprep.subr.mxu0 0.0
        %1513 = vmatpush1.msra.mxu0 %v282
        %1514 = vmatprep.subr.mxu0 0.0
        %1515 = vmatpush1.msra.mxu0 0.0
        %1516 = vmatprep.subr.mxu0 0.0
        %1517 = vmatpush1.msra.mxu0 0.0
        %1518 = vmatprep.subr.mxu0 0.0
        %1519 = vmatpush1.msra.mxu0 0.0
        %1520 = vmatprep.subr.mxu0 0.0
        %1521 = vmatpush1.msra.mxu0 0.0
        %1522 = vmatprep.subr.mxu0 0.0
        %1523 = vmatpush1.msra.mxu0 0.0
        %1524 = vmatprep.subr.mxu0 0.0
        %1525 = vmatpush1.msra.mxu0 0.0
        %1526 = vmatprep.subr.mxu0 0.0
        %1527 = vmatpush1.msra.mxu0 0.0
        %1528 = vmatprep.subr.mxu0 0.0
        %1529 = vmatpush1.msra.mxu0 0.0
        %1530 = vmatprep.subr.mxu0 0.0
        %1531 = vmatpush1.msra.mxu0 0.0
        %1532 = vmatprep.subr.mxu0 0.0
        %1533 = vmatpush1.msra.mxu0 0.0
        %1534 = vmatprep.subr.mxu0 0.0
        %1535 = vmatpush1.msra.mxu0 0.0
        %1536 = vmatprep.subr.mxu0 0.0
        %1537 = vmatpush1.msra.mxu0 0.0
        %1538 = vmatprep.subr.mxu0 0.0
        %1539 = vmatpush1.msra.mxu0 0.0
        %1540 = vmatprep.subr.mxu0 0.0
        %1541 = vmatpush1.msra.mxu0 0.0
        %1542 = vmatprep.subr.mxu0 0.0
        %1543 = vmatpush1.msra.mxu0 0.0
        %1544 = vmatprep.subr.mxu0 0.0
        %1545 = vmatpush1.msra.mxu0 0.0
        %1546 = vmatprep.subr.mxu0 0.0
        %1547 = vmatpush1.msra.mxu0 0.0
        %1548 = vmatprep.subr.mxu0 0.0
        %1549 = vmatpush1.msra.mxu0 0.0
        %1550 = vmatprep.subr.mxu0 0.0
        %1551 = vmatpush1.msra.mxu0 0.0
        %1552 = vmatprep.subr.mxu0 0.0
        %1553 = vmatpush1.msra.mxu0 0.0
        %1554 = vmatprep.subr.mxu0 0.0
        %1555 = vmatpush1.msra.mxu0 0.0
        %1556 = vmatprep.subr.mxu0 0.0
        %1557 = vmatpush1.msra.mxu0 0.0
        %1558 = vmatprep.subr.mxu0 0.0
        %1559 = vmatpush1.msra.mxu0 0.0
        %1560 = vmatprep.subr.mxu0 0.0
        %1561 = vmatpush1.msra.mxu0 0.0
        %1562 = vmatprep.mubr.f32.mxu0 0.0
        %1563 = vmatmul.mubr.f32.gmra.mrb[0].mxu0 %v1496
        %v1564 = vpop.f32.mrb[0].mxu0
        %v1565 = vadd.f32 0.0, %v1564
        %v1566 = vpop.f32.mrb[0].mxu0
        %1567 = vdwg.mxu0
        %v1568 = vsel %vm1216, %v1385, -inf
        %1569 = vmax.xlane.f32.xlu0 %v1568
        %v1570 = vpop.xlane.xlu0 %1569
        %v1571 = vsub.f32 %v1385, %v1570
        %v1572 = vmul.f32 %v1571, 1.442695
        %v1573 = vpow.pop %v1572
        %v1574 = vsel %vm1216, %v1573, 0.0
        %1575 = vadd.xlane.f32.xlu0 %v1574
        %v1576 = vpop.xlane.xlu0 %1575
        %v1577 = vrcp.pop %v1576
        %v1578 = vmul.f32 %v1576, %v1577
        %v1579 = vsub.f32 2.0, %v1578
        %v1580 = vmul.f32 %v1577, %v1579
        %v1581 = vmul.f32 %v1573, %v1580
        %v1583 = vsel %vm1216, %v1581, 0
        %1585 = vmatprep.subr.mxu0 0.0
        %1586 = vmatpush1.msra.mxu0 %v283
        %1587 = vmatprep.subr.mxu0 0.0
        %1588 = vmatpush1.msra.mxu0 %v284
        %1589 = vmatprep.subr.mxu0 0.0
        %1590 = vmatpush1.msra.mxu0 %v285
        %1591 = vmatprep.subr.mxu0 0.0
        %1592 = vmatpush1.msra.mxu0 %v286
        %1593 = vmatprep.subr.mxu0 0.0
        %1594 = vmatpush1.msra.mxu0 %v287
        %1595 = vmatprep.subr.mxu0 0.0
        %1596 = vmatpush1.msra.mxu0 %v288
        %1597 = vmatprep.subr.mxu0 0.0
        %1598 = vmatpush1.msra.mxu0 %v289
        %1599 = vmatprep.subr.mxu0 0.0
        %1600 = vmatpush1.msra.mxu0 %v290
        %1601 = vmatprep.subr.mxu0 0.0
        %1602 = vmatpush1.msra.mxu0 0.0
        %1603 = vmatprep.subr.mxu0 0.0
        %1604 = vmatpush1.msra.mxu0 0.0
        %1605 = vmatprep.subr.mxu0 0.0
        %1606 = vmatpush1.msra.mxu0 0.0
        %1607 = vmatprep.subr.mxu0 0.0
        %1608 = vmatpush1.msra.mxu0 0.0
        %1609 = vmatprep.subr.mxu0 0.0
        %1610 = vmatpush1.msra.mxu0 0.0
        %1611 = vmatprep.subr.mxu0 0.0
        %1612 = vmatpush1.msra.mxu0 0.0
        %1613 = vmatprep.subr.mxu0 0.0
        %1614 = vmatpush1.msra.mxu0 0.0
        %1615 = vmatprep.subr.mxu0 0.0
        %1616 = vmatpush1.msra.mxu0 0.0
        %1617 = vmatprep.subr.mxu0 0.0
        %1618 = vmatpush1.msra.mxu0 0.0
        %1619 = vmatprep.subr.mxu0 0.0
        %1620 = vmatpush1.msra.mxu0 0.0
        %1621 = vmatprep.subr.mxu0 0.0
        %1622 = vmatpush1.msra.mxu0 0.0
        %1623 = vmatprep.subr.mxu0 0.0
        %1624 = vmatpush1.msra.mxu0 0.0
        %1625 = vmatprep.subr.mxu0 0.0
        %1626 = vmatpush1.msra.mxu0 0.0
        %1627 = vmatprep.subr.mxu0 0.0
        %1628 = vmatpush1.msra.mxu0 0.0
        %1629 = vmatprep.subr.mxu0 0.0
        %1630 = vmatpush1.msra.mxu0 0.0
        %1631 = vmatprep.subr.mxu0 0.0
        %1632 = vmatpush1.msra.mxu0 0.0
        %1633 = vmatprep.subr.mxu0 0.0
        %1634 = vmatpush1.msra.mxu0 0.0
        %1635 = vmatprep.subr.mxu0 0.0
        %1636 = vmatpush1.msra.mxu0 0.0
        %1637 = vmatprep.subr.mxu0 0.0
        %1638 = vmatpush1.msra.mxu0 0.0
        %1639 = vmatprep.subr.mxu0 0.0
        %1640 = vmatpush1.msra.mxu0 0.0
        %1641 = vmatprep.subr.mxu0 0.0
        %1642 = vmatpush1.msra.mxu0 0.0
        %1643 = vmatprep.subr.mxu0 0.0
        %1644 = vmatpush1.msra.mxu0 0.0
        %1645 = vmatprep.subr.mxu0 0.0
        %1646 = vmatpush1.msra.mxu0 0.0
        %1647 = vmatprep.subr.mxu0 0.0
        %1648 = vmatpush1.msra.mxu0 0.0
        %1649 = vmatprep.mubr.f32.mxu0 0.0
        %1650 = vmatmul.mubr.f32.gmra.mrb[0].mxu0 %v1583
        %v1651 = vpop.f32.mrb[0].mxu0
        %v1652 = vadd.f32 0.0, %v1651
        %v1653 = vpop.f32.mrb[0].mxu0
        %1654 = vdwg.mxu0
        %v1655 = vsel %vm1474, %v1385, -inf
        %1656 = vmax.xlane.f32.xlu0 %v1655
        %v1657 = vpop.xlane.xlu0 %1656
        %v1658 = vsub.f32 %v1385, %v1657
        %v1659 = vmul.f32 %v1658, 1.442695
        %v1660 = vpow.pop %v1659
        %1662 = vrot.lane.b32.xlu0 %v1660, 64
        %v1663 = vpop.permute.xlu0 %1662
        %v1665 = vsel %vm1216, %v1663, 0.0
        %1666 = vadd.xlane.f32.xlu0 %v1665
        %v1667 = vpop.xlane.xlu0 %1666
        %v1668 = vrcp.pop %v1667
        %v1669 = vmul.f32 %v1667, %v1668
        %v1670 = vsub.f32 2.0, %v1669
        %v1671 = vmul.f32 %v1668, %v1670
        %v1672 = vmul.f32 %v1660, %v1671
        %1674 = vrot.lane.b32.xlu0 %v1672, 64
        %v1675 = vpop.permute.xlu0 %1674
        %v1676 = vsel %vm1216, %v1675, 0
        %1678 = vmatprep.subr.mxu0 0.0
        %1679 = vmatpush1.msra.mxu0 %v291
        %1680 = vmatprep.subr.mxu0 0.0
        %1681 = vmatpush1.msra.mxu0 %v292
        %1682 = vmatprep.subr.mxu0 0.0
        %1683 = vmatpush1.msra.mxu0 %v293
        %1684 = vmatprep.subr.mxu0 0.0
        %1685 = vmatpush1.msra.mxu0 %v294
        %1686 = vmatprep.subr.mxu0 0.0
        %1687 = vmatpush1.msra.mxu0 %v295
        %1688 = vmatprep.subr.mxu0 0.0
        %1689 = vmatpush1.msra.mxu0 %v296
        %1690 = vmatprep.subr.mxu0 0.0
        %1691 = vmatpush1.msra.mxu0 %v297
        %1692 = vmatprep.subr.mxu0 0.0
        %1693 = vmatpush1.msra.mxu0 %v298
        %1694 = vmatprep.subr.mxu0 0.0
        %1695 = vmatpush1.msra.mxu0 0.0
        %1696 = vmatprep.subr.mxu0 0.0
        %1697 = vmatpush1.msra.mxu0 0.0
        %1698 = vmatprep.subr.mxu0 0.0
        %1699 = vmatpush1.msra.mxu0 0.0
        %1700 = vmatprep.subr.mxu0 0.0
        %1701 = vmatpush1.msra.mxu0 0.0
        %1702 = vmatprep.subr.mxu0 0.0
        %1703 = vmatpush1.msra.mxu0 0.0
        %1704 = vmatprep.subr.mxu0 0.0
        %1705 = vmatpush1.msra.mxu0 0.0
        %1706 = vmatprep.subr.mxu0 0.0
        %1707 = vmatpush1.msra.mxu0 0.0
        %1708 = vmatprep.subr.mxu0 0.0
        %1709 = vmatpush1.msra.mxu0 0.0
        %1710 = vmatprep.subr.mxu0 0.0
        %1711 = vmatpush1.msra.mxu0 0.0
        %1712 = vmatprep.subr.mxu0 0.0
        %1713 = vmatpush1.msra.mxu0 0.0
        %1714 = vmatprep.subr.mxu0 0.0
        %1715 = vmatpush1.msra.mxu0 0.0
        %1716 = vmatprep.subr.mxu0 0.0
        %1717 = vmatpush1.msra.mxu0 0.0
        %1718 = vmatprep.subr.mxu0 0.0
        %1719 = vmatpush1.msra.mxu0 0.0
        %1720 = vmatprep.subr.mxu0 0.0
        %1721 = vmatpush1.msra.mxu0 0.0
        %1722 = vmatprep.subr.mxu0 0.0
        %1723 = vmatpush1.msra.mxu0 0.0
        %1724 = vmatprep.subr.mxu0 0.0
        %1725 = vmatpush1.msra.mxu0 0.0
        %1726 = vmatprep.subr.mxu0 0.0
        %1727 = vmatpush1.msra.mxu0 0.0
        %1728 = vmatprep.subr.mxu0 0.0
        %1729 = vmatpush1.msra.mxu0 0.0
        %1730 = vmatprep.subr.mxu0 0.0
        %1731 = vmatpush1.msra.mxu0 0.0
        %1732 = vmatprep.subr.mxu0 0.0
        %1733 = vmatpush1.msra.mxu0 0.0
        %1734 = vmatprep.subr.mxu0 0.0
        %1735 = vmatpush1.msra.mxu0 0.0
        %1736 = vmatprep.subr.mxu0 0.0
        %1737 = vmatpush1.msra.mxu0 0.0
        %1738 = vmatprep.subr.mxu0 0.0
        %1739 = vmatpush1.msra.mxu0 0.0
        %1740 = vmatprep.subr.mxu0 0.0
        %1741 = vmatpush1.msra.mxu0 0.0
        %1742 = vmatprep.mubr.f32.mxu0 0.0
        %1743 = vmatmul.mubr.f32.gmra.mrb[0].mxu0 %v1676
        %v1744 = vpop.f32.mrb[0].mxu0
        %v1745 = vadd.f32 0.0, %v1744
        %v1746 = vpop.f32.mrb[0].mxu0
        %1747 = vdwg.mxu0
        %v1748 = vsel %vm1216, %v1400, %v1492
        %v1749 = vsel %vm1216, %v1581, %v1672
        %1750 = vst [vmem:[%s258] sm:$0xff] %v1748
        %1751 = vst [vmem:[%s258 + $0x8] sm:$0xff] %v1749
        %1753 = vrot.lane.b32.xlu0 %v1565, 32
        %v1754 = vpop.permute.xlu0 %1753
        %1757 = vrot.lane.b32.xlu0 %v1652, 64
        %v1758 = vpop.permute.xlu0 %1757
        %1761 = vrot.lane.b32.xlu0 %v1745, 96
        %v1762 = vpop.permute.xlu0 %1761
        %v1764 = vsel %vm299, %v1471, %v1754
        %v1765 = vsel %vm1216, %v1764, %v1758
        %vm1766 = vcmask 785408
        %v1767 = vsel %vm1766, %v1765, %v1762
        %1768 = vst [vmem:[%s251] sm:$0xff] %v1767
        %s1769 = sand.u32 %s142, 1
        %s1770 = scalar_lea.sflag [#allocation3], %s1769
        %s1771 = sand.u32 %s142, 1
        %s1772 = smul.addr %s1771, 8
        %s1773 = scalar_lea.vmem [#allocation2], %s1772
        %s1774 = sand.u32 %s168, 1
        %s1775 = scalar_lea.sflag [#allocation5], %s1774
        %s1776 = sand.u32 %s168, 1
        %s1777 = smul.addr %s1776, 16
        %s1778 = scalar_lea.vmem [#allocation4], %s1777
        // Predicated region
        $region41: #{tpu_custom_call.1} parent=39 // pred_check
          %p1779 = pneg %p152
        $region42: #{tpu_custom_call.1} parent=39 // pred_check_branch
          %1781 = sbr.rel (%p1779) target = $region44
        $region43: #{tpu_custom_call.1} parent=39 // pred_region
          %s1783 = ssub.s32 128, 128
          %1784 = vsyncadd %s1770, %s1783
          %s1785 = smul.addr %s24, 128
          %s1786 = scalar_lea.hbm %s5, %s1785
          %s1788 = sshll.u32 %s1773, 4
          %s1789 = int_to_ptr.vmem [resolvable:$true] %s1788
          %1791 = dma.vmem_to_hbm [thread:$0]  %s1789, 128, %s1786, %s1770
        $region44: #{tpu_custom_call.1} parent=39 // pred_fallthru
          _
        // Predicated region
        $region45: #{tpu_custom_call.1} parent=39 // pred_check
          %p1792 = pneg %p178
        $region46: #{tpu_custom_call.1} parent=39 // pred_check_branch
          %1794 = sbr.rel (%p1792) target = $region48
        $region47: #{tpu_custom_call.1} parent=39 // pred_region
          %s1795 = smul.u32 2, %s24
          %s1797 = ssub.s32 256, 256
          %1798 = vsyncadd %s1775, %s1797
          %s1799 = smul.addr %s1795, 128
          %s1800 = scalar_lea.hbm %s6, %s1799
          %s1802 = sshll.u32 %s1778, 4
          %s1803 = int_to_ptr.vmem [resolvable:$true] %s1802
          %1805 = dma.vmem_to_hbm [thread:$0]  %s1803, 256, %s1800, %s1775
        $region48: #{tpu_custom_call.1} parent=39 // pred_fallthru
          _
      $region40: #{tpu_custom_call.1} parent=5 // pred_fallthru
        _
      %p1806 = scmp.le.s32.totalorder 2, %s19
      // Predicated region
      $region49: #{tpu_custom_call.1} parent=5 // pred_check
        %p1807 = pneg %p1806
      $region50: #{tpu_custom_call.1} parent=5 // pred_check_branch
        %1809 = sbr.rel (%p1807) target = $region52
      $region51: #{tpu_custom_call.1} parent=5 // pred_region
        %s1810 = ssub.s32 %s19, 2
        // Predicated region
        $region53: #{tpu_custom_call.1} parent=51 // pred_check
          %p1811 = pneg %p158
        $region54: #{tpu_custom_call.1} parent=51 // pred_check_branch
          %1813 = sbr.rel (%p1811) target = $region56
        $region55: #{tpu_custom_call.1} parent=51 // pred_region
          %s1814 = sand.u32 %s143, 1
          %s1815 = scalar_lea.sflag [#allocation3], %s1814
          %s1816 = sand.u32 %s143, 1
          %s1817 = smul.addr %s1816, 8
          %s1818 = scalar_lea.vmem [#allocation2], %s1817
          %1819 = dma.done %s1815, 128
        $region56: #{tpu_custom_call.1} parent=51 // pred_fallthru
          _
        // Predicated region
        $region57: #{tpu_custom_call.1} parent=51 // pred_check
          %p1820 = pneg %p184
        $region58: #{tpu_custom_call.1} parent=51 // pred_check_branch
          %1822 = sbr.rel (%p1820) target = $region60
        $region59: #{tpu_custom_call.1} parent=51 // pred_region
          %s1823 = sand.u32 %s169, 1
          %s1824 = scalar_lea.sflag [#allocation5], %s1823
          %s1825 = sand.u32 %s169, 1
          %s1826 = smul.addr %s1825, 16
          %s1827 = scalar_lea.vmem [#allocation4], %s1826
          %1828 = dma.done %s1824, 256
        $region60: #{tpu_custom_call.1} parent=51 // pred_fallthru
          _
      $region52: #{tpu_custom_call.1} parent=5 // pred_fallthru
        _
    $region6: #{tpu_custom_call.1} parent=1 // loop_footer
      %s23 = sadd.s32 1, %s19
    $region7: #{tpu_custom_call.1} parent=1 // loop_footer_branch
      %18 = sbr.rel target = $region3
    $region8: #{tpu_custom_call.1} parent=1 // loop_exit
      _
    %1829 = vsyncpa [#allocation3], 1
    %s1830 = scalar_lea.sflag [#allocation3], 1
    %1831 = vsyncpa %s1830, 1
    %1832 = vsyncpa [#allocation5], 1
    %s1833 = scalar_lea.sflag [#allocation5], 1
    %1834 = vsyncpa %s1833, 1

</llo_original>
